<compile_context>
chip_gen: v7x
topology: tpu7x:2x2x1
jax: 0.10.0
libtpu: 0.0.40
codegen_flags: <defaults>
</compile_context>

<pallas_src>
import functools

import jax
import jax.numpy as jnp
from jax.experimental import pallas as pl
from jax.experimental.pallas import tpu as pltpu

KSIZE = 7          # SpatialAttention kernel_size (PyTorch default)
SPAD = 3           # padding = 3 for kernel_size 7

VMEM_BUDGET = 16 << 20   # working-set target for tile sizing
VMEM_LIMIT = 32 << 20    # raised scoped VMEM limit (< 64 MiB physical on v7x)


def _round_up(x, m):
    return ((x + m - 1) // m) * m


def _pick_hw_tile(hw, bytes_per_col):
    """Largest HW tile (multiple of 128, divisor of hw) within the VMEM budget."""
    cap = max(VMEM_BUDGET // max(bytes_per_col, 1), 128)
    best = 0
    t = 128
    limit = min(hw, cap)
    while t <= limit:
        if hw % t == 0:
            best = t
        t += 128
    if best:
        return best
    # No lane-aligned divisor fits: fall back to one full-HW block per batch.
    # TODO(synk): masked ragged-tail tiling for huge, non-128-divisible HW.
    return hw


def _sigmoid(z):
    # exp goes to the EUP; reciprocal (exact) instead of a VPU divide chain
    return pl.reciprocal(1.0 + jnp.exp(-z))


# ---------------------------------------------------------------------------
# Pallas kernels
# ---------------------------------------------------------------------------
def _global_pool_kernel(x_ref, avg_ref, max_ref, sum_sc, max_sc, *, inv_hw):
    """Grid (N, HW_tiles); accumulate sum & running max over spatial tiles."""
    t = pl.program_id(1)

    @pl.when(t == 0)
    def _():
        sum_sc[...] = jnp.zeros_like(sum_sc)
        max_sc[...] = jnp.full_like(max_sc, -jnp.inf)

    x = x_ref[0]                                               # (C, thw)
    sum_sc[...] += jnp.sum(x, axis=-1, keepdims=True)          # (C, 1)
    max_sc[...] = jnp.maximum(max_sc[...],
                              jnp.max(x, axis=-1, keepdims=True))

    @pl.when(t == pl.num_programs(1) - 1)
    def _():
        avg_ref[0] = sum_sc[...] * inv_hw
        max_ref[0] = max_sc[...]


def _ca_mlp_kernel(pooled_ref, w1_ref, w2_ref, o_ref):
    """sigmoid(MLP(avg) + MLP(max)) with avg/max batched as one (2N, C) op."""
    p = pooled_ref[...]                                        # (2N, C)
    h = jnp.maximum(
        jnp.dot(p, w1_ref[...], preferred_element_type=jnp.float32), 0.0)
    logits = jnp.dot(h, w2_ref[...], preferred_element_type=jnp.float32)
    n = o_ref.shape[0]
    o_ref[...] = _sigmoid(logits[:n] + logits[n:])             # (N, C)


def _stats_kernel(x_ref, att_ref, stats_ref, *, inv_c):
    """Per-pixel channel mean/max of y = att * x (y never hits HBM)."""
    x = x_ref[0]                                               # (C, thw)
    a = att_ref[0]                                             # (C, 1)
    y = x * a
    mean_c = jnp.sum(y, axis=0, keepdims=True) * inv_c         # (1, thw)
    max_c = jnp.max(y, axis=0, keepdims=True)                  # (1, thw)
    stats_ref[0] = jnp.concatenate([mean_c, max_c], axis=0)    # (2, thw)


def _apply_kernel(x_ref, att_ref, logit_ref, o_ref):
    """out = (x * channel_att) * sigmoid(spatial_logit), fully fused."""
    x = x_ref[0]                                               # (C, thw)
    a = att_ref[0]                                             # (C, 1)
    s = _sigmoid(logit_ref[0])                                 # (1, thw)
    o_ref[0] = x * a * s


# ---------------------------------------------------------------------------
# pallas_call wrappers
# ---------------------------------------------------------------------------
def global_pool(x3):
    N, C, HW = x3.shape
    thw = _pick_hw_tile(HW, bytes_per_col=8 * C)
    kernel = functools.partial(_global_pool_kernel, inv_hw=1.0 / HW)
    return pl.pallas_call(
        kernel,
        out_shape=(jax.ShapeDtypeStruct((N, C, 1), jnp.float32),
                   jax.ShapeDtypeStruct((N, C, 1), jnp.float32)),
        grid_spec=pltpu.PrefetchScalarGridSpec(
            num_scalar_prefetch=0,
            grid=(N, HW // thw),
            in_specs=[pl.BlockSpec((1, C, thw), lambda n, t: (n, 0, t))],
            out_specs=[pl.BlockSpec((1, C, 1), lambda n, t: (n, 0, 0)),
                       pl.BlockSpec((1, C, 1), lambda n, t: (n, 0, 0))],
            scratch_shapes=[pltpu.VMEM((C, 1), jnp.float32),
                            pltpu.VMEM((C, 1), jnp.float32)]),
        compiler_params=pltpu.CompilerParams(
            dimension_semantics=("parallel", "arbitrary"),
            vmem_limit_bytes=VMEM_LIMIT),
    )(x3)


def channel_attention(pooled, w1p, w2p):
    N2, C = pooled.shape
    # tiny operands -> single whole-array block is the right call here
    return pl.pallas_call(
        _ca_mlp_kernel,
        out_shape=jax.ShapeDtypeStruct((N2 // 2, C), jnp.float32),
    )(pooled, w1p, w2p)


def channel_stats(x3, att):
    N, C, HW = x3.shape
    thw = _pick_hw_tile(HW, bytes_per_col=8 * C + 16)
    kernel = functools.partial(_stats_kernel, inv_c=1.0 / C)
    return pl.pallas_call(
        kernel,
        out_shape=jax.ShapeDtypeStruct((N, 2, HW), jnp.float32),
        grid_spec=pltpu.PrefetchScalarGridSpec(
            num_scalar_prefetch=0,
            grid=(N, HW // thw),
            in_specs=[pl.BlockSpec((1, C, thw), lambda n, t: (n, 0, t)),
                      pl.BlockSpec((1, C, 1), lambda n, t: (n, 0, 0))],
            out_specs=pl.BlockSpec((1, 2, thw), lambda n, t: (n, 0, t))),
        compiler_params=pltpu.CompilerParams(
            dimension_semantics=("parallel", "parallel"),
            vmem_limit_bytes=VMEM_LIMIT),
    )(x3, att)


def apply_attention(x3, att, logits3):
    N, C, HW = x3.shape
    thw = _pick_hw_tile(HW, bytes_per_col=16 * C + 8)
    return pl.pallas_call(
        _apply_kernel,
        out_shape=jax.ShapeDtypeStruct((N, C, HW), jnp.float32),
        grid_spec=pltpu.PrefetchScalarGridSpec(
            num_scalar_prefetch=0,
            grid=(N, HW // thw),
            in_specs=[pl.BlockSpec((1, C, thw), lambda n, t: (n, 0, t)),
                      pl.BlockSpec((1, C, 1), lambda n, t: (n, 0, 0)),
                      pl.BlockSpec((1, 1, thw), lambda n, t: (n, 0, t))],
            out_specs=pl.BlockSpec((1, C, thw), lambda n, t: (n, 0, t))),
        compiler_params=pltpu.CompilerParams(
            dimension_semantics=("parallel", "parallel"),
            vmem_limit_bytes=VMEM_LIMIT),
    )(x3, att, logits3)


# ---------------------------------------------------------------------------
# Parameter init (MLP hidden dim padded only to a sublane multiple)
# ---------------------------------------------------------------------------
def init_cbam(in_channels, ratio=16, key=jax.random.PRNGKey(0)):
    cr = max(in_channels // ratio, 1)
    k1, k2, k3 = jax.random.split(key, 3)
    w1 = jax.random.normal(k1, (in_channels, cr), jnp.float32) \
        * (2.0 / in_channels) ** 0.5
    w2 = jax.random.normal(k2, (cr, in_channels), jnp.float32) \
        * (2.0 / cr) ** 0.5
    w_sp = jax.random.normal(k3, (1, 2, KSIZE, KSIZE), jnp.float32) \
        * (2.0 / (2 * KSIZE * KSIZE)) ** 0.5

    crp = _round_up(cr, 8)
    w1p = jnp.pad(w1, ((0, 0), (0, crp - cr)))                 # (C, crp)
    w2p = jnp.pad(w2, ((0, crp - cr), (0, 0)))                 # (crp, C)
    return dict(w1=w1p, w2=w2p, w_sp=w_sp)                     # w_sp: OIHW


# ---------------------------------------------------------------------------
# Forward (NCHW in, NCHW out -- no transposes anywhere)
# ---------------------------------------------------------------------------
@jax.jit
def cbam_forward(params, x_nchw):
    x = x_nchw.astype(jnp.float32)
    N, C, H, W = x.shape
    HW = H * W
    x3 = x.reshape(N, C, HW)                                   # metadata-only

    # 1) global avg / max pool over the spatial axis
    avg_p, max_p = global_pool(x3)                             # (N, C, 1) each

    # 2) shared-MLP channel attention (tiny glue to stack avg & max)
    pooled = jnp.concatenate([avg_p[:, :, 0], max_p[:, :, 0]], axis=0)  # (2N,C)
    att_flat = channel_attention(pooled, params["w1"], params["w2"])    # (N, C)
    att = att_flat[:, :, None]                                 # (N, C, 1)

    # 3) fused channel re-scale + per-pixel channel mean/max (lane-dense)
    stats = channel_stats(x3, att)                             # (N, 2, HW)

    # 4) 7x7 spatial conv on the tiny 2-channel stats map (glue; ~N*2*HW elems)
    s4 = stats.reshape(N, 2, H, W)
    logits = jax.lax.conv_general_dilated(
        s4, params["w_sp"], (1, 1), [(SPAD, SPAD), (SPAD, SPAD)],
        dimension_numbers=("NCHW", "OIHW", "NCHW"))            # (N, 1, H, W)
    logits3 = logits.reshape(N, 1, HW)

    # 5) fused final apply: (x * att) * sigmoid(spatial)
    out3 = apply_attention(x3, att, logits3)                   # (N, C, HW)
    return out3.reshape(N, C, H, W)


# ---------------------------------------------------------------------------
# Pure-JAX reference (for in-script correctness check)
# ---------------------------------------------------------------------------
def _reference_cbam(params, x_nchw):
    x = x_nchw.astype(jnp.float32)
    avg = jnp.mean(x, axis=(2, 3))                             # (N, C)
    mx = jnp.max(x, axis=(2, 3))

    def mlp(v):
        return jnp.maximum(v @ params["w1"], 0.0) @ params["w2"]

    att = 1.0 / (1.0 + jnp.exp(-(mlp(avg) + mlp(mx))))         # (N, C)
    xc = x * att[:, :, None, None]
    a_sp = jnp.mean(xc, axis=1, keepdims=True)
    m_sp = jnp.max(xc, axis=1, keepdims=True)
    s2 = jnp.concatenate([a_sp, m_sp], axis=1)                 # (N, 2, H, W)
    conv = jax.lax.conv_general_dilated(
        s2, params["w_sp"], (1, 1), [(SPAD, SPAD), (SPAD, SPAD)],
        dimension_numbers=("NCHW", "OIHW", "NCHW"))
    sp = 1.0 / (1.0 + jnp.exp(-conv))
    return xc * sp


# ---------------------------------------------------------------------------
if __name__ == "__main__":
    N, C, H, W = 2, 64, 16, 16
    params = init_cbam(C)
    x = jax.random.normal(jax.random.PRNGKey(0), (N, C, H, W), jnp.float32)

    out = jax.block_until_ready(cbam_forward(params, x))

    assert out.shape == (N, C, H, W), out.shape
    assert bool(jnp.all(jnp.isfinite(out)))

    ref = _reference_cbam(params, x)
    max_err = float(jnp.max(jnp.abs(out - ref)))
    assert max_err < 1e-4, f"mismatch vs reference: {max_err}"
    print("KERNEL_OK")
</pallas_src>

<mosaic_0001>
module attributes {stable_mosaic.version = 11 : i64} {
  func.func @_global_pool_kernel(%arg0: i32, %arg1: i32, %arg2: memref<1x64x256xf32, #tpu.memory_space<vmem>>, %arg3: memref<1x64x1xf32, #tpu.memory_space<vmem>>, %arg4: memref<1x64x1xf32, #tpu.memory_space<vmem>>, %arg5: memref<64x1xf32, #tpu.memory_space<vmem>>, %arg6: memref<64x1xf32, #tpu.memory_space<vmem>>) attributes {dimension_semantics = [#tpu.dimension_semantics<parallel>, #tpu.dimension_semantics<arbitrary>], iteration_bounds = array<i64: 2, 1>, scalar_prefetch = 0 : i64, scratch_operands = 2 : i64, tpu.core_type = #tpu.core_type<tc>, window_params = [{transform_indices = @transform_0, window_bounds = array<i64: 1, 64, 256>}, {transform_indices = @transform_1, window_bounds = array<i64: 1, 64, 1>}, {transform_indices = @transform_2, window_bounds = array<i64: 1, 64, 1>}]} {
    %c0_i32 = arith.constant 0 : i32
    %0 = arith.cmpi eq, %arg1, %c0_i32 : i32
    %1 = arith.extui %0 : i1 to i32
    %c0_i32_0 = arith.constant 0 : i32
    %2 = arith.cmpi ne, %1, %c0_i32_0 : i32
    scf.if %2 {
      %cst_14 = arith.constant 0.000000e+00 : f32
      %18 = vector.broadcast %cst_14 : f32 to vector<64x1xf32>
      %c0_15 = arith.constant 0 : index
      %c0_16 = arith.constant 0 : index
      %19 = vector.load %arg5[%c0_15, %c0_16] : memref<64x1xf32, #tpu.memory_space<vmem>>, vector<64x1xf32>
      tpu.vector_store %arg5[%c0_15, %c0_16], %18 {strides = array<i32>} : memref<64x1xf32, #tpu.memory_space<vmem>>, vector<64x1xf32>,
      %cst_17 = arith.constant 0xFF800000 : f32
      %20 = vector.broadcast %cst_17 : f32 to vector<64x1xf32>
      %c0_18 = arith.constant 0 : index
      %c0_19 = arith.constant 0 : index
      %21 = vector.load %arg6[%c0_18, %c0_19] : memref<64x1xf32, #tpu.memory_space<vmem>>, vector<64x1xf32>
      tpu.vector_store %arg6[%c0_18, %c0_19], %20 {strides = array<i32>} : memref<64x1xf32, #tpu.memory_space<vmem>>, vector<64x1xf32>,
    } else {
    }
    %c0 = arith.constant 0 : index
    %c0_1 = arith.constant 0 : index
    %c0_2 = arith.constant 0 : index
    %3 = vector.load %arg2[%c0, %c0_1, %c0_2] : memref<1x64x256xf32, #tpu.memory_space<vmem>>, vector<1x64x256xf32>
    %4 = vector.shape_cast %3 : vector<1x64x256xf32> to vector<64x256xf32>
    %c0_3 = arith.constant 0 : index
    %c0_4 = arith.constant 0 : index
    %5 = vector.load %arg5[%c0_3, %c0_4] : memref<64x1xf32, #tpu.memory_space<vmem>>, vector<64x1xf32>
    %cst = arith.constant dense<0.000000e+00> : vector<64xf32>
    %6 = vector.multi_reduction <add>, %4, %cst [1] : vector<64x256xf32> to vector<64xf32>
    %7 = vector.shape_cast %6 : vector<64xf32> to vector<64x1xf32>
    %8 = arith.addf %5, %7 : vector<64x1xf32>
    %c0_5 = arith.constant 0 : index
    %c0_6 = arith.constant 0 : index
    %9 = vector.load %arg5[%c0_5, %c0_6] : memref<64x1xf32, #tpu.memory_space<vmem>>, vector<64x1xf32>
    tpu.vector_store %arg5[%c0_5, %c0_6], %8 {strides = array<i32>} : memref<64x1xf32, #tpu.memory_space<vmem>>, vector<64x1xf32>,
    %c0_7 = arith.constant 0 : index
    %c0_8 = arith.constant 0 : index
    %10 = vector.load %arg6[%c0_7, %c0_8] : memref<64x1xf32, #tpu.memory_space<vmem>>, vector<64x1xf32>
    %cst_9 = arith.constant dense<0xFF800000> : vector<64xf32>
    %11 = vector.multi_reduction <maximumf>, %4, %cst_9 [1] : vector<64x256xf32> to vector<64xf32>
    %12 = vector.shape_cast %11 : vector<64xf32> to vector<64x1xf32>
    %13 = arith.maximumf %10, %12 : vector<64x1xf32>
    %c0_10 = arith.constant 0 : index
    %c0_11 = arith.constant 0 : index
    %14 = vector.load %arg6[%c0_10, %c0_11] : memref<64x1xf32, #tpu.memory_space<vmem>>, vector<64x1xf32>
    tpu.vector_store %arg6[%c0_10, %c0_11], %13 {strides = array<i32>} : memref<64x1xf32, #tpu.memory_space<vmem>>, vector<64x1xf32>,
    %c0_i32_12 = arith.constant 0 : i32
    %15 = arith.cmpi eq, %arg1, %c0_i32_12 : i32
    %16 = arith.extui %15 : i1 to i32
    %c0_i32_13 = arith.constant 0 : i32
    %17 = arith.cmpi ne, %16, %c0_i32_13 : i32
    scf.if %17 {
      %c0_14 = arith.constant 0 : index
      %c0_15 = arith.constant 0 : index
      %18 = vector.load %arg5[%c0_14, %c0_15] : memref<64x1xf32, #tpu.memory_space<vmem>>, vector<64x1xf32>
      %cst_16 = arith.constant 3.906250e-03 : f32
      %19 = vector.broadcast %cst_16 : f32 to vector<64x1xf32>
      %20 = arith.mulf %18, %19 : vector<64x1xf32>
      %c0_17 = arith.constant 0 : index
      %c0_18 = arith.constant 0 : index
      %c0_19 = arith.constant 0 : index
      %21 = vector.load %arg3[%c0_17, %c0_18, %c0_19] : memref<1x64x1xf32, #tpu.memory_space<vmem>>, vector<1x64x1xf32>
      %22 = vector.shape_cast %21 : vector<1x64x1xf32> to vector<64x1xf32>
      %23 = vector.shape_cast %20 : vector<64x1xf32> to vector<1x64x1xf32>
      tpu.vector_store %arg3[%c0_17, %c0_18, %c0_19], %23 {strides = array<i32>} : memref<1x64x1xf32, #tpu.memory_space<vmem>>, vector<1x64x1xf32>,
      %c0_20 = arith.constant 0 : index
      %c0_21 = arith.constant 0 : index
      %24 = vector.load %arg6[%c0_20, %c0_21] : memref<64x1xf32, #tpu.memory_space<vmem>>, vector<64x1xf32>
      %c0_22 = arith.constant 0 : index
      %c0_23 = arith.constant 0 : index
      %c0_24 = arith.constant 0 : index
      %25 = vector.load %arg4[%c0_22, %c0_23, %c0_24] : memref<1x64x1xf32, #tpu.memory_space<vmem>>, vector<1x64x1xf32>
      %26 = vector.shape_cast %25 : vector<1x64x1xf32> to vector<64x1xf32>
      %27 = vector.shape_cast %24 : vector<64x1xf32> to vector<1x64x1xf32>
      tpu.vector_store %arg4[%c0_22, %c0_23, %c0_24], %27 {strides = array<i32>} : memref<1x64x1xf32, #tpu.memory_space<vmem>>, vector<1x64x1xf32>,
    } else {
    }
    return
  }
  func.func @transform_0(%arg0: i32, %arg1: i32) -> (i32, i32, i32) {
    %c0_i32 = arith.constant 0 : i32
    %c0_i32_0 = arith.constant 0 : i32
    return %arg0, %c0_i32, %arg1 : i32, i32, i32
  }
  func.func @transform_1(%arg0: i32, %arg1: i32) -> (i32, i32, i32) {
    %c0_i32 = arith.constant 0 : i32
    %c0_i32_0 = arith.constant 0 : i32
    %c0_i32_1 = arith.constant 0 : i32
    return %arg0, %c0_i32, %c0_i32_0 : i32, i32, i32
  }
  func.func @transform_2(%arg0: i32, %arg1: i32) -> (i32, i32, i32) {
    %c0_i32 = arith.constant 0 : i32
    %c0_i32_0 = arith.constant 0 : i32
    %c0_i32_1 = arith.constant 0 : i32
    return %arg0, %c0_i32, %c0_i32_0 : i32, i32, i32
  }
}

module attributes {stable_mosaic.version = 11 : i64} {
  func.func @_ca_mlp_kernel(%arg0: memref<4x64xf32, #tpu.memory_space<vmem>>, %arg1: memref<64x8xf32, #tpu.memory_space<vmem>>, %arg2: memref<8x64xf32, #tpu.memory_space<vmem>>, %arg3: memref<2x64xf32, #tpu.memory_space<vmem>>) attributes {dimension_semantics = [], scalar_prefetch = 0 : i64, scratch_operands = 0 : i64, tpu.core_type = #tpu.core_type<tc>} {
    %c0 = arith.constant 0 : index
    %c0_0 = arith.constant 0 : index
    %0 = vector.load %arg0[%c0, %c0_0] : memref<4x64xf32, #tpu.memory_space<vmem>>, vector<4x64xf32>
    %c0_1 = arith.constant 0 : index
    %c0_2 = arith.constant 0 : index
    %1 = vector.load %arg1[%c0_1, %c0_2] : memref<64x8xf32, #tpu.memory_space<vmem>>, vector<64x8xf32>
    %cst = arith.constant dense<0.000000e+00> : vector<4x8xf32>
    %2 = tpu.matmul %0, %1, %cst {dimension_numbers = #tpu.dot_dimension_numbers<[1], [0], [0], [1], [0, 0, 1, 1], [], []>} : vector<4x64xf32>, vector<64x8xf32>, vector<4x8xf32> -> vector<4x8xf32>
    %cst_3 = arith.constant 0.000000e+00 : f32
    %3 = vector.broadcast %cst_3 : f32 to vector<4x8xf32>
    %4 = arith.maximumf %2, %3 : vector<4x8xf32>
    %c0_4 = arith.constant 0 : index
    %c0_5 = arith.constant 0 : index
    %5 = vector.load %arg2[%c0_4, %c0_5] : memref<8x64xf32, #tpu.memory_space<vmem>>, vector<8x64xf32>
    %cst_6 = arith.constant dense<0.000000e+00> : vector<4x64xf32>
    %6 = tpu.matmul %4, %5, %cst_6 {dimension_numbers = #tpu.dot_dimension_numbers<[1], [0], [0], [1], [0, 0, 1, 1], [], []>} : vector<4x8xf32>, vector<8x64xf32>, vector<4x64xf32> -> vector<4x64xf32>
    %7 = vector.extract_strided_slice %6 {offsets = [0, 0], sizes = [2, 64], strides = [1, 1]} : vector<4x64xf32> to vector<2x64xf32>
    %8 = vector.extract_strided_slice %6 {offsets = [2, 0], sizes = [2, 64], strides = [1, 1]} : vector<4x64xf32> to vector<2x64xf32>
    %9 = arith.addf %7, %8 : vector<2x64xf32>
    %cst_7 = arith.constant 0.000000e+00 : f32
    %10 = vector.broadcast %cst_7 : f32 to vector<2x64xf32>
    %11 = arith.subf %10, %9 : vector<2x64xf32>
    %12 = math.exp %11 : vector<2x64xf32>
    %cst_8 = arith.constant 1.000000e+00 : f32
    %13 = vector.broadcast %cst_8 : f32 to vector<2x64xf32>
    %14 = arith.addf %13, %12 : vector<2x64xf32>
    %15 = tpu.reciprocal %14 : vector<2x64xf32> -> vector<2x64xf32>
    %c0_9 = arith.constant 0 : index
    %c0_10 = arith.constant 0 : index
    %16 = vector.load %arg3[%c0_9, %c0_10] : memref<2x64xf32, #tpu.memory_space<vmem>>, vector<2x64xf32>
    tpu.vector_store %arg3[%c0_9, %c0_10], %15 {strides = array<i32>} : memref<2x64xf32, #tpu.memory_space<vmem>>, vector<2x64xf32>,
    return
  }
}

module attributes {stable_mosaic.version = 11 : i64} {
  func.func @_stats_kernel(%arg0: i32, %arg1: i32, %arg2: memref<1x64x256xf32, #tpu.memory_space<vmem>>, %arg3: memref<1x64x1xf32, #tpu.memory_space<vmem>>, %arg4: memref<1x2x256xf32, #tpu.memory_space<vmem>>) attributes {dimension_semantics = [#tpu.dimension_semantics<parallel>, #tpu.dimension_semantics<parallel>], iteration_bounds = array<i64: 2, 1>, scalar_prefetch = 0 : i64, scratch_operands = 0 : i64, tpu.core_type = #tpu.core_type<tc>, window_params = [{transform_indices = @transform_0, window_bounds = array<i64: 1, 64, 256>}, {transform_indices = @transform_1, window_bounds = array<i64: 1, 64, 1>}, {transform_indices = @transform_2, window_bounds = array<i64: 1, 2, 256>}]} {
    %c0 = arith.constant 0 : index
    %c0_0 = arith.constant 0 : index
    %c0_1 = arith.constant 0 : index
    %0 = vector.load %arg2[%c0, %c0_0, %c0_1] : memref<1x64x256xf32, #tpu.memory_space<vmem>>, vector<1x64x256xf32>
    %1 = vector.shape_cast %0 : vector<1x64x256xf32> to vector<64x256xf32>
    %c0_2 = arith.constant 0 : index
    %c0_3 = arith.constant 0 : index
    %c0_4 = arith.constant 0 : index
    %2 = vector.load %arg3[%c0_2, %c0_3, %c0_4] : memref<1x64x1xf32, #tpu.memory_space<vmem>>, vector<1x64x1xf32>
    %3 = vector.shape_cast %2 : vector<1x64x1xf32> to vector<64x1xf32>
    %4 = vector.broadcast %3 : vector<64x1xf32> to vector<64x256xf32>
    %5 = arith.mulf %1, %4 : vector<64x256xf32>
    %cst = arith.constant dense<0.000000e+00> : vector<256xf32>
    %6 = vector.multi_reduction <add>, %5, %cst [0] : vector<64x256xf32> to vector<256xf32>
    %7 = vector.shape_cast %6 : vector<256xf32> to vector<1x256xf32>
    %cst_5 = arith.constant 1.562500e-02 : f32
    %8 = vector.broadcast %cst_5 : f32 to vector<1x256xf32>
    %9 = arith.mulf %7, %8 : vector<1x256xf32>
    %cst_6 = arith.constant dense<0xFF800000> : vector<256xf32>
    %10 = vector.multi_reduction <maximumf>, %5, %cst_6 [0] : vector<64x256xf32> to vector<256xf32>
    %11 = vector.shape_cast %10 : vector<256xf32> to vector<1x256xf32>
    %12 = tpu.concatenate %9, %11 in 0 : vector<1x256xf32>, vector<1x256xf32> -> vector<2x256xf32>
    %c0_7 = arith.constant 0 : index
    %c0_8 = arith.constant 0 : index
    %c0_9 = arith.constant 0 : index
    %13 = vector.load %arg4[%c0_7, %c0_8, %c0_9] : memref<1x2x256xf32, #tpu.memory_space<vmem>>, vector<1x2x256xf32>
    %14 = vector.shape_cast %13 : vector<1x2x256xf32> to vector<2x256xf32>
    %15 = vector.shape_cast %12 : vector<2x256xf32> to vector<1x2x256xf32>
    tpu.vector_store %arg4[%c0_7, %c0_8, %c0_9], %15 {strides = array<i32>} : memref<1x2x256xf32, #tpu.memory_space<vmem>>, vector<1x2x256xf32>,
    return
  }
  func.func @transform_0(%arg0: i32, %arg1: i32) -> (i32, i32, i32) {
    %c0_i32 = arith.constant 0 : i32
    %c0_i32_0 = arith.constant 0 : i32
    return %arg0, %c0_i32, %arg1 : i32, i32, i32
  }
  func.func @transform_1(%arg0: i32, %arg1: i32) -> (i32, i32, i32) {
    %c0_i32 = arith.constant 0 : i32
    %c0_i32_0 = arith.constant 0 : i32
    %c0_i32_1 = arith.constant 0 : i32
    return %arg0, %c0_i32, %c0_i32_0 : i32, i32, i32
  }
  func.func @transform_2(%arg0: i32, %arg1: i32) -> (i32, i32, i32) {
    %c0_i32 = arith.constant 0 : i32
    %c0_i32_0 = arith.constant 0 : i32
    return %arg0, %c0_i32, %arg1 : i32, i32, i32
  }
}

module attributes {stable_mosaic.version = 11 : i64} {
  func.func @_apply_kernel(%arg0: i32, %arg1: i32, %arg2: memref<1x64x256xf32, #tpu.memory_space<vmem>>, %arg3: memref<1x64x1xf32, #tpu.memory_space<vmem>>, %arg4: memref<1x1x256xf32, #tpu.memory_space<vmem>>, %arg5: memref<1x64x256xf32, #tpu.memory_space<vmem>>) attributes {dimension_semantics = [#tpu.dimension_semantics<parallel>, #tpu.dimension_semantics<parallel>], iteration_bounds = array<i64: 2, 1>, scalar_prefetch = 0 : i64, scratch_operands = 0 : i64, tpu.core_type = #tpu.core_type<tc>, window_params = [{transform_indices = @transform_0, window_bounds = array<i64: 1, 64, 256>}, {transform_indices = @transform_1, window_bounds = array<i64: 1, 64, 1>}, {transform_indices = @transform_2, window_bounds = array<i64: 1, 1, 256>}, {transform_indices = @transform_3, window_bounds = array<i64: 1, 64, 256>}]} {
    %c0 = arith.constant 0 : index
    %c0_0 = arith.constant 0 : index
    %c0_1 = arith.constant 0 : index
    %0 = vector.load %arg2[%c0, %c0_0, %c0_1] : memref<1x64x256xf32, #tpu.memory_space<vmem>>, vector<1x64x256xf32>
    %1 = vector.shape_cast %0 : vector<1x64x256xf32> to vector<64x256xf32>
    %c0_2 = arith.constant 0 : index
    %c0_3 = arith.constant 0 : index
    %c0_4 = arith.constant 0 : index
    %2 = vector.load %arg3[%c0_2, %c0_3, %c0_4] : memref<1x64x1xf32, #tpu.memory_space<vmem>>, vector<1x64x1xf32>
    %3 = vector.shape_cast %2 : vector<1x64x1xf32> to vector<64x1xf32>
    %c0_5 = arith.constant 0 : index
    %c0_6 = arith.constant 0 : index
    %c0_7 = arith.constant 0 : index
    %4 = vector.load %arg4[%c0_5, %c0_6, %c0_7] : memref<1x1x256xf32, #tpu.memory_space<vmem>>, vector<1x1x256xf32>
    %5 = vector.shape_cast %4 : vector<1x1x256xf32> to vector<1x256xf32>
    %cst = arith.constant 0.000000e+00 : f32
    %6 = vector.broadcast %cst : f32 to vector<1x256xf32>
    %7 = arith.subf %6, %5 : vector<1x256xf32>
    %8 = math.exp %7 : vector<1x256xf32>
    %cst_8 = arith.constant 1.000000e+00 : f32
    %9 = vector.broadcast %cst_8 : f32 to vector<1x256xf32>
    %10 = arith.addf %9, %8 : vector<1x256xf32>
    %11 = tpu.reciprocal %10 : vector<1x256xf32> -> vector<1x256xf32>
    %12 = vector.broadcast %3 : vector<64x1xf32> to vector<64x256xf32>
    %13 = arith.mulf %1, %12 : vector<64x256xf32>
    %14 = vector.broadcast %11 : vector<1x256xf32> to vector<64x256xf32>
    %15 = arith.mulf %13, %14 : vector<64x256xf32>
    %c0_9 = arith.constant 0 : index
    %c0_10 = arith.constant 0 : index
    %c0_11 = arith.constant 0 : index
    %16 = vector.load %arg5[%c0_9, %c0_10, %c0_11] : memref<1x64x256xf32, #tpu.memory_space<vmem>>, vector<1x64x256xf32>
    %17 = vector.shape_cast %16 : vector<1x64x256xf32> to vector<64x256xf32>
    %18 = vector.shape_cast %15 : vector<64x256xf32> to vector<1x64x256xf32>
    tpu.vector_store %arg5[%c0_9, %c0_10, %c0_11], %18 {strides = array<i32>} : memref<1x64x256xf32, #tpu.memory_space<vmem>>, vector<1x64x256xf32>,
    return
  }
  func.func @transform_0(%arg0: i32, %arg1: i32) -> (i32, i32, i32) {
    %c0_i32 = arith.constant 0 : i32
    %c0_i32_0 = arith.constant 0 : i32
    return %arg0, %c0_i32, %arg1 : i32, i32, i32
  }
  func.func @transform_1(%arg0: i32, %arg1: i32) -> (i32, i32, i32) {
    %c0_i32 = arith.constant 0 : i32
    %c0_i32_0 = arith.constant 0 : i32
    %c0_i32_1 = arith.constant 0 : i32
    return %arg0, %c0_i32, %c0_i32_0 : i32, i32, i32
  }
  func.func @transform_2(%arg0: i32, %arg1: i32) -> (i32, i32, i32) {
    %c0_i32 = arith.constant 0 : i32
    %c0_i32_0 = arith.constant 0 : i32
    return %arg0, %c0_i32, %arg1 : i32, i32, i32
  }
  func.func @transform_3(%arg0: i32, %arg1: i32) -> (i32, i32, i32) {
    %c0_i32 = arith.constant 0 : i32
    %c0_i32_0 = arith.constant 0 : i32
    return %arg0, %c0_i32, %arg1 : i32, i32, i32
  }
}

</mosaic_0001>

<llo_original>
// kernel: cbam_forward.5
$region0: #{cbam_forward.5}
  #allocation0 [shape = 'u32[]', space=smem, size = 0x4, offset = 0x4, fixed_abs, tag = 'smem constant byte address 0x4 - core index']
  #allocation1 [shape = 'u32[144,128]{1,0:T(1,128)}', space=vmem, size = 0x12000, scoped, tag = 'internal scratch']
  %s0 = inlined_call_operand.vmem [shape: f32[4,64], index: 0, kind: input, shape index: {}]
  %s1 = inlined_call_operand.vmem [shape: f32[64,8], index: 1, kind: input, shape index: {}]
  %s2 = inlined_call_operand.vmem [shape: f32[8,64], index: 2, kind: input, shape index: {}]
  %s3 = inlined_call_operand.vmem [shape: f32[2,64], index: 3, kind: output, shape index: {}]
  %s4 = sld [smem:[#allocation0]]
  $region22: #{cbam_forward.5} parent=0
    _
  %s6 = ssub.s32 1, %s4
  %s7 = scalar_select 0, %s6, %s4
  // Predicated region
  $region2: #{cbam_forward.5} parent=0 // pred_check
    _
  $region3: #{cbam_forward.5} parent=0 // pred_check_branch
    %9 = sbr.rel (0) target = $region5
  $region4: #{cbam_forward.5} parent=0 // pred_region
    _
  $region5: #{cbam_forward.5} parent=0 // pred_fallthru
    _
  // Predicated region
  $region6: #{cbam_forward.5} parent=0 // pred_check
    _
  $region7: #{cbam_forward.5} parent=0 // pred_check_branch
    %11 = sbr.rel (0) target = $region9
  $region8: #{cbam_forward.5} parent=0 // pred_region
    _
  $region9: #{cbam_forward.5} parent=0 // pred_fallthru
    _
  // Predicated region
  $region10: #{cbam_forward.5} parent=0 // pred_check
    _
  $region11: #{cbam_forward.5} parent=0 // pred_check_branch
    %13 = sbr.rel (0) target = $region13
  $region12: #{cbam_forward.5} parent=0 // pred_region
    _
  $region13: #{cbam_forward.5} parent=0 // pred_fallthru
    _
  %v14 = vld [vmem:[%s0] sm:$0xf]
  %v15 = vld [vmem:[%s1] sm:$0xff]
  %v16 = vld [vmem:[%s1 + $0x8] sm:$0xff]
  %v17 = vld [vmem:[%s1 + $0x10] sm:$0xff]
  %v18 = vld [vmem:[%s1 + $0x18] sm:$0xff]
  %v19 = vld [vmem:[%s1 + $0x20] sm:$0xff]
  %v20 = vld [vmem:[%s1 + $0x28] sm:$0xff]
  %v21 = vld [vmem:[%s1 + $0x30] sm:$0xff]
  %v22 = vld [vmem:[%s1 + $0x38] sm:$0xff]
  %vm23 = vcmask 523264
  %v25 = vsel %vm23, %v14, 0
  %27 = vmatprep.subr.mxu0 0.0
  %28 = vmatpush1.msra.mxu0 %v15
  %29 = vmatprep.subr.mxu0 0.0
  %30 = vmatpush1.msra.mxu0 %v16
  %31 = vmatprep.subr.mxu0 0.0
  %32 = vmatpush1.msra.mxu0 %v17
  %33 = vmatprep.subr.mxu0 0.0
  %34 = vmatpush1.msra.mxu0 %v18
  %35 = vmatprep.subr.mxu0 0.0
  %36 = vmatpush1.msra.mxu0 %v19
  %37 = vmatprep.subr.mxu0 0.0
  %38 = vmatpush1.msra.mxu0 %v20
  %39 = vmatprep.subr.mxu0 0.0
  %40 = vmatpush1.msra.mxu0 %v21
  %41 = vmatprep.subr.mxu0 0.0
  %42 = vmatpush1.msra.mxu0 %v22
  %43 = vmatprep.subr.mxu0 0.0
  %44 = vmatpush1.msra.mxu0 0.0
  %45 = vmatprep.subr.mxu0 0.0
  %46 = vmatpush1.msra.mxu0 0.0
  %47 = vmatprep.subr.mxu0 0.0
  %48 = vmatpush1.msra.mxu0 0.0
  %49 = vmatprep.subr.mxu0 0.0
  %50 = vmatpush1.msra.mxu0 0.0
  %51 = vmatprep.subr.mxu0 0.0
  %52 = vmatpush1.msra.mxu0 0.0
  %53 = vmatprep.subr.mxu0 0.0
  %54 = vmatpush1.msra.mxu0 0.0
  %55 = vmatprep.subr.mxu0 0.0
  %56 = vmatpush1.msra.mxu0 0.0
  %57 = vmatprep.subr.mxu0 0.0
  %58 = vmatpush1.msra.mxu0 0.0
  %59 = vmatprep.subr.mxu0 0.0
  %60 = vmatpush1.msra.mxu0 0.0
  %61 = vmatprep.subr.mxu0 0.0
  %62 = vmatpush1.msra.mxu0 0.0
  %63 = vmatprep.subr.mxu0 0.0
  %64 = vmatpush1.msra.mxu0 0.0
  %65 = vmatprep.subr.mxu0 0.0
  %66 = vmatpush1.msra.mxu0 0.0
  %67 = vmatprep.subr.mxu0 0.0
  %68 = vmatpush1.msra.mxu0 0.0
  %69 = vmatprep.subr.mxu0 0.0
  %70 = vmatpush1.msra.mxu0 0.0
  %71 = vmatprep.subr.mxu0 0.0
  %72 = vmatpush1.msra.mxu0 0.0
  %73 = vmatprep.subr.mxu0 0.0
  %74 = vmatpush1.msra.mxu0 0.0
  %75 = vmatprep.subr.mxu0 0.0
  %76 = vmatpush1.msra.mxu0 0.0
  %77 = vmatprep.subr.mxu0 0.0
  %78 = vmatpush1.msra.mxu0 0.0
  %79 = vmatprep.subr.mxu0 0.0
  %80 = vmatpush1.msra.mxu0 0.0
  %81 = vmatprep.subr.mxu0 0.0
  %82 = vmatpush1.msra.mxu0 0.0
  %83 = vmatprep.subr.mxu0 0.0
  %84 = vmatpush1.msra.mxu0 0.0
  %85 = vmatprep.subr.mxu0 0.0
  %86 = vmatpush1.msra.mxu0 0.0
  %87 = vmatprep.subr.mxu0 0.0
  %88 = vmatpush1.msra.mxu0 0.0
  %89 = vmatprep.subr.mxu0 0.0
  %90 = vmatpush1.msra.mxu0 0.0
  %91 = vmatprep.mubr.f32.mxu0 0.0
  %92 = vmatmul.mubr.f32.gmra.mrb[0].mxu0 %v25
  %v93 = vpop.f32.mrb[0].mxu0
  %v94 = vadd.f32 0.0, %v93
  %v95 = vpop.f32.mrb[0].mxu0
  %96 = vdwg.mxu0
  %v97 = vmax.f32 %v94, 0.0
  %v98 = vld [vmem:[%s2] sm:$0xff]
  %vm99 = vcmask 64512
  %v101 = vsel %vm99, %v97, 0
  %103 = vmatprep.subr.mxu0 0.0
  %104 = vmatpush1.msra.mxu0 %v98
  %105 = vmatprep.subr.mxu0 0.0
  %106 = vmatpush1.msra.mxu0 0.0
  %107 = vmatprep.subr.mxu0 0.0
  %108 = vmatpush1.msra.mxu0 0.0
  %109 = vmatprep.subr.mxu0 0.0
  %110 = vmatpush1.msra.mxu0 0.0
  %111 = vmatprep.subr.mxu0 0.0
  %112 = vmatpush1.msra.mxu0 0.0
  %113 = vmatprep.subr.mxu0 0.0
  %114 = vmatpush1.msra.mxu0 0.0
  %115 = vmatprep.subr.mxu0 0.0
  %116 = vmatpush1.msra.mxu0 0.0
  %117 = vmatprep.subr.mxu0 0.0
  %118 = vmatpush1.msra.mxu0 0.0
  %119 = vmatprep.subr.mxu0 0.0
  %120 = vmatpush1.msra.mxu0 0.0
  %121 = vmatprep.subr.mxu0 0.0
  %122 = vmatpush1.msra.mxu0 0.0
  %123 = vmatprep.subr.mxu0 0.0
  %124 = vmatpush1.msra.mxu0 0.0
  %125 = vmatprep.subr.mxu0 0.0
  %126 = vmatpush1.msra.mxu0 0.0
  %127 = vmatprep.subr.mxu0 0.0
  %128 = vmatpush1.msra.mxu0 0.0
  %129 = vmatprep.subr.mxu0 0.0
  %130 = vmatpush1.msra.mxu0 0.0
  %131 = vmatprep.subr.mxu0 0.0
  %132 = vmatpush1.msra.mxu0 0.0
  %133 = vmatprep.subr.mxu0 0.0
  %134 = vmatpush1.msra.mxu0 0.0
  %135 = vmatprep.subr.mxu0 0.0
  %136 = vmatpush1.msra.mxu0 0.0
  %137 = vmatprep.subr.mxu0 0.0
  %138 = vmatpush1.msra.mxu0 0.0
  %139 = vmatprep.subr.mxu0 0.0
  %140 = vmatpush1.msra.mxu0 0.0
  %141 = vmatprep.subr.mxu0 0.0
  %142 = vmatpush1.msra.mxu0 0.0
  %143 = vmatprep.subr.mxu0 0.0
  %144 = vmatpush1.msra.mxu0 0.0
  %145 = vmatprep.subr.mxu0 0.0
  %146 = vmatpush1.msra.mxu0 0.0
  %147 = vmatprep.subr.mxu0 0.0
  %148 = vmatpush1.msra.mxu0 0.0
  %149 = vmatprep.subr.mxu0 0.0
  %150 = vmatpush1.msra.mxu0 0.0
  %151 = vmatprep.subr.mxu0 0.0
  %152 = vmatpush1.msra.mxu0 0.0
  %153 = vmatprep.subr.mxu0 0.0
  %154 = vmatpush1.msra.mxu0 0.0
  %155 = vmatprep.subr.mxu0 0.0
  %156 = vmatpush1.msra.mxu0 0.0
  %157 = vmatprep.subr.mxu0 0.0
  %158 = vmatpush1.msra.mxu0 0.0
  %159 = vmatprep.subr.mxu0 0.0
  %160 = vmatpush1.msra.mxu0 0.0
  %161 = vmatprep.subr.mxu0 0.0
  %162 = vmatpush1.msra.mxu0 0.0
  %163 = vmatprep.subr.mxu0 0.0
  %164 = vmatpush1.msra.mxu0 0.0
  %165 = vmatprep.subr.mxu0 0.0
  %166 = vmatpush1.msra.mxu0 0.0
  %167 = vmatprep.mubr.f32.mxu0 0.0
  %168 = vmatmul.mubr.f32.gmra.mrb[0].mxu0 %v101
  %v169 = vpop.f32.mrb[0].mxu0
  %v170 = vadd.f32 0.0, %v169
  %v171 = vpop.f32.mrb[0].mxu0
  %172 = vdwg.mxu0
  %v174 = vrot.slane %v170, 2
  %v176 = vadd.f32 %v170, %v174
  %v177 = vsub.f32 0.0, %v176
  %v178 = vmul.f32 %v177, 1.442695
  %v179 = vpow.pop %v178
  %v180 = vadd.f32 %v179, 1.0
  %v181 = vrcp.pop %v180
  %vm182 = vcmask 517120
  %183 = vst.msk [vmem:[%s3] sm:$0x3] %vm182, %v181
  // Predicated region
  $region14: #{cbam_forward.5} parent=0 // pred_check
    _
  $region15: #{cbam_forward.5} parent=0 // pred_check_branch
    %185 = sbr.rel (0) target = $region17
  $region16: #{cbam_forward.5} parent=0 // pred_region
    _
  $region17: #{cbam_forward.5} parent=0 // pred_fallthru
    _
  // Predicated region
  $region18: #{cbam_forward.5} parent=0 // pred_check
    _
  $region19: #{cbam_forward.5} parent=0 // pred_check_branch
    %187 = sbr.rel (0) target = $region21
  $region20: #{cbam_forward.5} parent=0 // pred_region
    _
  $region21: #{cbam_forward.5} parent=0 // pred_fallthru
    _

// kernel: cbam_forward.4
$region0: #{cbam_forward.4}
  #allocation0 [shape = 'u32[]', space=smem, size = 0x4, offset = 0x4, fixed_abs, tag = 'smem constant byte address 0x4 - core index']
  #allocation1 [shape = 'u32[144,128]{1,0:T(1,128)}', space=vmem, size = 0x12000, scoped, tag = 'internal scratch']
  #allocation2 [shape = 'f32[64,1]{1,0:T(8,128)}', space=vmem, size = 0x8000, scoped, tag = 'scratch operand']
  #allocation3 [shape = 'f32[64,1]{1,0:T(8,128)}', space=vmem, size = 0x8000, scoped, tag = 'scratch operand']
  %s0 = inlined_call_operand.vmem [shape: f32[2,64,256], index: 0, kind: input, shape index: {}]
  %s1 = inlined_call_operand.vmem [shape: f32[2,64,1], index: 1, kind: output, shape index: {0}]
  %s2 = inlined_call_operand.vmem [shape: f32[2,64,1], index: 2, kind: output, shape index: {1}]
  %3 = xla_tuple %s1, %s2
  %s4 = sld [smem:[#allocation0]]
  $region53: #{cbam_forward.4} parent=0
    _
  %s6 = ssub.s32 1, %s4
  %s7 = scalar_select 0, %s6, %s4
  loop: start=0, step=1, limit=4
  $region2: #{cbam_forward.4} parent=0 // loop_pre_header
    _
  $region3: #{cbam_forward.4} parent=0 // loop_header
    %s9 = sphi 0, %s13
    %p10 = scmp.ge.s32.totalorder %s9, 4
    %s16 = sphi 0, %s28
    %s17 = sphi 0, %s24
    %s18 = sphi 0, %s16
    %s19 = sphi 0, %s17
    %s20 = sphi 0, %s18
    %s21 = sphi 0, %s19
    %s33 = sphi 0, %s35
    %s36 = sphi 0, %s33
    %s37 = sphi 0, %s36
    %s53 = sphi 0, %s37
    %s59 = sphi 0, %s61
    %s62 = sphi 0, %s59
    %s63 = sphi 0, %s62
    %s79 = sphi 0, %s63
    %s85 = sphi 0, %s87
    %s88 = sphi 0, %s85
    %s89 = sphi 0, %s88
    %s105 = sphi 0, %s89
  $region4: #{cbam_forward.4} parent=0 // loop_header_branch
    %12 = sbr.rel (%p10) target = $region8
  $region5: #{cbam_forward.4} parent=0 // loop_body
    %s14 = ssub.s32 %s9, 1
    %s15 = ssub.s32 %s9, 2
    %s22 = sadd.s32 1, %s17
    %p23 = scmp.ge.s32.totalorder %s22, 1
    %s24 = scalar_select %p23, 0, %s22
    %s25 = sadd.s32 1, %s16
    %s26 = scalar_select %p23, %s25, %s16
    %p27 = scmp.ge.s32.totalorder %s26, 2
    %s28 = scalar_select %p27, 0, %s26
    %s29 = ssub.s32 %s16, %s28
    %s30 = ssub.s32 %s17, %s24
    %s31 = sor.u32 %s29, %s30
    %p32 = scmp.eq.s32.totalorder %s31, 0
    %s34 = sadd.s32 %s33, 1
    %s35 = scalar_select %p32, %s33, %s34
    %p38 = pneg %p32
    %p39 = scmp.eq.s32.totalorder %s9, 1
    %p40 = por %p38, %p39
    %p41 = scmp.ne.s32.totalorder %s33, %s36
    %p42 = scmp.eq.s32.totalorder %s9, 0
    %p43 = por %p41, %p42
    %p44 = scmp.ne.s32.totalorder %s33, %s36
    %p45 = scmp.eq.s32.totalorder %s14, 1
    %p46 = por %p44, %p45
    %p47 = scmp.ne.s32.totalorder %s36, %s37
    %p48 = scmp.eq.s32.totalorder %s14, 0
    %p49 = por %p47, %p48
    %p50 = scmp.ne.s32.totalorder %s36, %s37
    %p51 = scmp.eq.s32.totalorder %s15, 1
    %p52 = por %p50, %p51
    %p54 = scmp.ne.s32.totalorder %s37, %s53
    %p55 = scmp.eq.s32.totalorder %s15, 0
    %p56 = por %p54, %p55
    %s57 = ssub.s32 %s16, %s28
    %p58 = scmp.eq.s32.totalorder %s57, 0
    %s60 = sadd.s32 %s59, 1
    %s61 = scalar_select %p58, %s59, %s60
    %p64 = pneg %p58
    %p65 = scmp.eq.s32.totalorder %s9, 1
    %p66 = por %p64, %p65
    %p67 = scmp.ne.s32.totalorder %s59, %s62
    %p68 = scmp.eq.s32.totalorder %s9, 0
    %p69 = por %p67, %p68
    %p70 = scmp.ne.s32.totalorder %s59, %s62
    %p71 = scmp.eq.s32.totalorder %s14, 1
    %p72 = por %p70, %p71
    %p73 = scmp.ne.s32.totalorder %s62, %s63
    %p74 = scmp.eq.s32.totalorder %s14, 0
    %p75 = por %p73, %p74
    %p76 = scmp.ne.s32.totalorder %s62, %s63
    %p77 = scmp.eq.s32.totalorder %s15, 1
    %p78 = por %p76, %p77
    %p80 = scmp.ne.s32.totalorder %s63, %s79
    %p81 = scmp.eq.s32.totalorder %s15, 0
    %p82 = por %p80, %p81
    %s83 = ssub.s32 %s16, %s28
    %p84 = scmp.eq.s32.totalorder %s83, 0
    %s86 = sadd.s32 %s85, 1
    %s87 = scalar_select %p84, %s85, %s86
    %p90 = pneg %p84
    %p91 = scmp.eq.s32.totalorder %s9, 1
    %p92 = por %p90, %p91
    %p93 = scmp.ne.s32.totalorder %s85, %s88
    %p94 = scmp.eq.s32.totalorder %s9, 0
    %p95 = por %p93, %p94
    %p96 = scmp.ne.s32.totalorder %s85, %s88
    %p97 = scmp.eq.s32.totalorder %s14, 1
    %p98 = por %p96, %p97
    %p99 = scmp.ne.s32.totalorder %s88, %s89
    %p100 = scmp.eq.s32.totalorder %s14, 0
    %p101 = por %p99, %p100
    %p102 = scmp.ne.s32.totalorder %s88, %s89
    %p103 = scmp.eq.s32.totalorder %s15, 1
    %p104 = por %p102, %p103
    %p106 = scmp.ne.s32.totalorder %s89, %s105
    %p107 = scmp.eq.s32.totalorder %s15, 0
    %p108 = por %p106, %p107
    %p109 = scmp.le.s32.totalorder 1, %s9
    %p110 = scmp.lt.s32.totalorder %s9, 3
    %p111 = pnand %p109, %p110
    %p112 = pneg %p111
    // Predicated region
    $region9: #{cbam_forward.4} parent=5 // pred_check
      _
    $region10: #{cbam_forward.4} parent=5 // pred_check_branch
      %114 = sbr.rel (%p111) target = $region12
    $region11: #{cbam_forward.4} parent=5 // pred_region
      %s115 = ssub.s32 %s9, 1
    $region12: #{cbam_forward.4} parent=5 // pred_fallthru
      _
    %p116 = scmp.lt.s32.totalorder %s9, 2
    // Predicated region
    $region13: #{cbam_forward.4} parent=5 // pred_check
      %p117 = pneg %p116
    $region14: #{cbam_forward.4} parent=5 // pred_check_branch
      %119 = sbr.rel (%p117) target = $region16
    $region15: #{cbam_forward.4} parent=5 // pred_region
      // Predicated region
      $region17: #{cbam_forward.4} parent=15 // pred_check
        %p120 = pneg %p43
      $region18: #{cbam_forward.4} parent=15 // pred_check_branch
        %122 = sbr.rel (%p120) target = $region20
      $region19: #{cbam_forward.4} parent=15 // pred_region
        %s123 = smul.u32 2, %s17
        %p124 = scmp.lt.s32.totalorder %s16, 1
        %s125 = scalar_select %p124, %s16, 1
        %p126 = scmp.lt.s32.totalorder %s123, 1
        %s127 = scalar_select %p126, %s123, 1
        %s128 = smul.addr %s125, 16
        %s129 = sadd.s32 %s127, %s128
        %s130 = smul.addr %s129, 8
        %s131 = scalar_lea.vmem %s0, %s130
        %s132 = smul.u32 2, %s17
      $region20: #{cbam_forward.4} parent=15 // pred_fallthru
        _
    $region16: #{cbam_forward.4} parent=5 // pred_fallthru
      _
    %p133 = scmp.le.s32.totalorder 1, %s9
    %p134 = scmp.lt.s32.totalorder %s9, 3
    %p135 = pnand %p133, %p134
    %p136 = pneg %p135
    // Predicated region
    $region21: #{cbam_forward.4} parent=5 // pred_check
      _
    $region22: #{cbam_forward.4} parent=5 // pred_check_branch
      %138 = sbr.rel (%p135) target = $region24
    $region23: #{cbam_forward.4} parent=5 // pred_region
      %s139 = ssub.s32 %s9, 1
      %s140 = smul.u32 2, %s19
      %p141 = scmp.lt.s32.totalorder %s18, 1
      %s142 = scalar_select %p141, %s18, 1
      %p143 = scmp.lt.s32.totalorder %s140, 1
      %s144 = scalar_select %p143, %s140, 1
      %s145 = smul.addr %s142, 16
      %s146 = sadd.s32 %s144, %s145
      %s147 = smul.addr %s146, 8
      %s148 = scalar_lea.vmem %s0, %s147
      %p149 = pneg %p49
      %p150 = pneg %p46
      %p151 = pneg %p75
      %p152 = pneg %p72
      %p153 = scmp.lt.s32.totalorder %s18, 1
      %s154 = scalar_select %p153, %s18, 1
      %s155 = smul.addr %s154, 8
      %s156 = smul.addr %s155, 8
      %s157 = scalar_lea.vmem %s1, %s156
      %p158 = pneg %p101
      %p159 = pneg %p98
      %p160 = scmp.lt.s32.totalorder %s18, 1
      %s161 = scalar_select %p160, %s18, 1
      %s162 = smul.addr %s161, 8
      %s163 = smul.addr %s162, 8
      %s164 = scalar_lea.vmem %s2, %s163
      %s165 = smul.u32 2, %s19
      %p166 = scmp.lt.s32.totalorder %s18, 1
      %s167 = scalar_select %p166, %s18, 1
      %p168 = scmp.lt.s32.totalorder %s165, 1
      %s169 = scalar_select %p168, %s165, 1
      %s170 = smul.addr %s167, 16
      %s171 = sadd.s32 %s169, %s170
      %s172 = smul.addr %s171, 8
      %s173 = scalar_lea.vmem %s0, %s172
      %s174 = smul.u32 2, %s19
      %p175 = scmp.lt.s32.totalorder %s18, 1
      %s176 = scalar_select %p175, %s18, 1
      %s177 = smul.addr %s176, 8
      %s178 = smul.addr %s177, 8
      %s179 = scalar_lea.vmem %s1, %s178
      %p180 = scmp.lt.s32.totalorder %s18, 1
      %s181 = scalar_select %p180, %s18, 1
      %s182 = smul.addr %s181, 8
      %s183 = smul.addr %s182, 8
      %s184 = scalar_lea.vmem %s2, %s183
      %p185 = scmp.eq.s32.totalorder %s19, 0
      // Predicated region
      $region25: #{cbam_forward.4} parent=23 // pred_check
        %p186 = pneg %p185
      $region26: #{cbam_forward.4} parent=23 // pred_check_branch
        %188 = sbr.rel (%p186) target = $region28
      $region27: #{cbam_forward.4} parent=23 // pred_region
        %vm189 = vcmask 7168
        %190 = vst.msk [vmem:[#allocation2] sm:$0xff] %vm189, 0.0
        %191 = vst.msk [vmem:[#allocation2 + $0x8] sm:$0xff] %vm189, 0.0
        %192 = vst.msk [vmem:[#allocation2 + $0x10] sm:$0xff] %vm189, 0.0
        %193 = vst.msk [vmem:[#allocation2 + $0x18] sm:$0xff] %vm189, 0.0
        %194 = vst.msk [vmem:[#allocation2 + $0x20] sm:$0xff] %vm189, 0.0
        %195 = vst.msk [vmem:[#allocation2 + $0x28] sm:$0xff] %vm189, 0.0
        %196 = vst.msk [vmem:[#allocation2 + $0x30] sm:$0xff] %vm189, 0.0
        %197 = vst.msk [vmem:[#allocation2 + $0x38] sm:$0xff] %vm189, 0.0
        %198 = vst.msk [vmem:[#allocation3] sm:$0xff] %vm189, -inf
        %199 = vst.msk [vmem:[#allocation3 + $0x8] sm:$0xff] %vm189, -inf
        %200 = vst.msk [vmem:[#allocation3 + $0x10] sm:$0xff] %vm189, -inf
        %201 = vst.msk [vmem:[#allocation3 + $0x18] sm:$0xff] %vm189, -inf
        %202 = vst.msk [vmem:[#allocation3 + $0x20] sm:$0xff] %vm189, -inf
        %203 = vst.msk [vmem:[#allocation3 + $0x28] sm:$0xff] %vm189, -inf
        %204 = vst.msk [vmem:[#allocation3 + $0x30] sm:$0xff] %vm189, -inf
        %205 = vst.msk [vmem:[#allocation3 + $0x38] sm:$0xff] %vm189, -inf
      $region28: #{cbam_forward.4} parent=23 // pred_fallthru
        _
      %v206 = vld [vmem:[%s173] sm:$0xff]
      %v207 = vld [vmem:[%s173 + $0x8] sm:$0xff]
      %v208 = vld [vmem:[%s173 + $0x10] sm:$0xff]
      %v209 = vld [vmem:[%s173 + $0x18] sm:$0xff]
      %v210 = vld [vmem:[%s173 + $0x20] sm:$0xff]
      %v211 = vld [vmem:[%s173 + $0x28] sm:$0xff]
      %v212 = vld [vmem:[%s173 + $0x30] sm:$0xff]
      %v213 = vld [vmem:[%s173 + $0x38] sm:$0xff]
      %v214 = vld [vmem:[%s173 + $0x40] sm:$0xff]
      %v215 = vld [vmem:[%s173 + $0x48] sm:$0xff]
      %v216 = vld [vmem:[%s173 + $0x50] sm:$0xff]
      %v217 = vld [vmem:[%s173 + $0x58] sm:$0xff]
      %v218 = vld [vmem:[%s173 + $0x60] sm:$0xff]
      %v219 = vld [vmem:[%s173 + $0x68] sm:$0xff]
      %v220 = vld [vmem:[%s173 + $0x70] sm:$0xff]
      %v221 = vld [vmem:[%s173 + $0x78] sm:$0xff]
      %v222 = vld [vmem:[#allocation2] sm:$0xff]
      %v223 = vld [vmem:[#allocation2 + $0x8] sm:$0xff]
      %v224 = vld [vmem:[#allocation2 + $0x10] sm:$0xff]
      %v225 = vld [vmem:[#allocation2 + $0x18] sm:$0xff]
      %v226 = vld [vmem:[#allocation2 + $0x20] sm:$0xff]
      %v227 = vld [vmem:[#allocation2 + $0x28] sm:$0xff]
      %v228 = vld [vmem:[#allocation2 + $0x30] sm:$0xff]
      %v229 = vld [vmem:[#allocation2 + $0x38] sm:$0xff]
      %v230 = vadd.f32 %v206, %v207
      %231 = vadd.xlane.f32.xlu0 %v230
      %v232 = vpop.xlane.xlu0 %231
      %v233 = vadd.f32 %v208, %v209
      %234 = vadd.xlane.f32.xlu0 %v233
      %v235 = vpop.xlane.xlu0 %234
      %v236 = vadd.f32 %v210, %v211
      %237 = vadd.xlane.f32.xlu0 %v236
      %v238 = vpop.xlane.xlu0 %237
      %v239 = vadd.f32 %v212, %v213
      %240 = vadd.xlane.f32.xlu0 %v239
      %v241 = vpop.xlane.xlu0 %240
      %v242 = vadd.f32 %v214, %v215
      %243 = vadd.xlane.f32.xlu0 %v242
      %v244 = vpop.xlane.xlu0 %243
      %v245 = vadd.f32 %v216, %v217
      %246 = vadd.xlane.f32.xlu0 %v245
      %v247 = vpop.xlane.xlu0 %246
      %v248 = vadd.f32 %v218, %v219
      %249 = vadd.xlane.f32.xlu0 %v248
      %v250 = vpop.xlane.xlu0 %249
      %v251 = vadd.f32 %v220, %v221
      %252 = vadd.xlane.f32.xlu0 %v251
      %v253 = vpop.xlane.xlu0 %252
      %v254 = vadd.f32 %v222, %v232
      %v255 = vadd.f32 %v223, %v235
      %v256 = vadd.f32 %v224, %v238
      %v257 = vadd.f32 %v225, %v241
      %v258 = vadd.f32 %v226, %v244
      %v259 = vadd.f32 %v227, %v247
      %v260 = vadd.f32 %v228, %v250
      %v261 = vadd.f32 %v229, %v253
      %vm262 = vcmask 7168
      %263 = vst.msk [vmem:[#allocation2] sm:$0xff] %vm262, %v254
      %264 = vst.msk [vmem:[#allocation2 + $0x8] sm:$0xff] %vm262, %v255
      %265 = vst.msk [vmem:[#allocation2 + $0x10] sm:$0xff] %vm262, %v256
      %266 = vst.msk [vmem:[#allocation2 + $0x18] sm:$0xff] %vm262, %v257
      %267 = vst.msk [vmem:[#allocation2 + $0x20] sm:$0xff] %vm262, %v258
      %268 = vst.msk [vmem:[#allocation2 + $0x28] sm:$0xff] %vm262, %v259
      %269 = vst.msk [vmem:[#allocation2 + $0x30] sm:$0xff] %vm262, %v260
      %270 = vst.msk [vmem:[#allocation2 + $0x38] sm:$0xff] %vm262, %v261
      %v271 = vld [vmem:[#allocation3] sm:$0xff]
      %v272 = vld [vmem:[#allocation3 + $0x8] sm:$0xff]
      %v273 = vld [vmem:[#allocation3 + $0x10] sm:$0xff]
      %v274 = vld [vmem:[#allocation3 + $0x18] sm:$0xff]
      %v275 = vld [vmem:[#allocation3 + $0x20] sm:$0xff]
      %v276 = vld [vmem:[#allocation3 + $0x28] sm:$0xff]
      %v277 = vld [vmem:[#allocation3 + $0x30] sm:$0xff]
      %v278 = vld [vmem:[#allocation3 + $0x38] sm:$0xff]
      %v279 = vmax.f32 %v206, %v207
      %280 = vmax.xlane.f32.xlu0 %v279
      %v281 = vpop.xlane.xlu0 %280
      %v282 = vmax.f32 %v208, %v209
      %283 = vmax.xlane.f32.xlu0 %v282
      %v284 = vpop.xlane.xlu0 %283
      %v285 = vmax.f32 %v210, %v211
      %286 = vmax.xlane.f32.xlu0 %v285
      %v287 = vpop.xlane.xlu0 %286
      %v288 = vmax.f32 %v212, %v213
      %289 = vmax.xlane.f32.xlu0 %v288
      %v290 = vpop.xlane.xlu0 %289
      %v291 = vmax.f32 %v214, %v215
      %292 = vmax.xlane.f32.xlu0 %v291
      %v293 = vpop.xlane.xlu0 %292
      %v294 = vmax.f32 %v216, %v217
      %295 = vmax.xlane.f32.xlu0 %v294
      %v296 = vpop.xlane.xlu0 %295
      %v297 = vmax.f32 %v218, %v219
      %298 = vmax.xlane.f32.xlu0 %v297
      %v299 = vpop.xlane.xlu0 %298
      %v300 = vmax.f32 %v220, %v221
      %301 = vmax.xlane.f32.xlu0 %v300
      %v302 = vpop.xlane.xlu0 %301
      %v303 = vmax.f32 %v271, %v281
      %v304 = vmax.f32 %v272, %v284
      %v305 = vmax.f32 %v273, %v287
      %v306 = vmax.f32 %v274, %v290
      %v307 = vmax.f32 %v275, %v293
      %v308 = vmax.f32 %v276, %v296
      %v309 = vmax.f32 %v277, %v299
      %v310 = vmax.f32 %v278, %v302
      %311 = vst.msk [vmem:[#allocation3] sm:$0xff] %vm262, %v303
      %312 = vst.msk [vmem:[#allocation3 + $0x8] sm:$0xff] %vm262, %v304
      %313 = vst.msk [vmem:[#allocation3 + $0x10] sm:$0xff] %vm262, %v305
      %314 = vst.msk [vmem:[#allocation3 + $0x18] sm:$0xff] %vm262, %v306
      %315 = vst.msk [vmem:[#allocation3 + $0x20] sm:$0xff] %vm262, %v307
      %316 = vst.msk [vmem:[#allocation3 + $0x28] sm:$0xff] %vm262, %v308
      %317 = vst.msk [vmem:[#allocation3 + $0x30] sm:$0xff] %vm262, %v309
      %318 = vst.msk [vmem:[#allocation3 + $0x38] sm:$0xff] %vm262, %v310
      // Predicated region
      $region29: #{cbam_forward.4} parent=23 // pred_check
        %p319 = pneg %p185
      $region30: #{cbam_forward.4} parent=23 // pred_check_branch
        %321 = sbr.rel (%p319) target = $region32
      $region31: #{cbam_forward.4} parent=23 // pred_region
        %v322 = vld [vmem:[#allocation2] sm:$0xff]
        %v323 = vld [vmem:[#allocation2 + $0x8] sm:$0xff]
        %v324 = vld [vmem:[#allocation2 + $0x10] sm:$0xff]
        %v325 = vld [vmem:[#allocation2 + $0x18] sm:$0xff]
        %v326 = vld [vmem:[#allocation2 + $0x20] sm:$0xff]
        %v327 = vld [vmem:[#allocation2 + $0x28] sm:$0xff]
        %v328 = vld [vmem:[#allocation2 + $0x30] sm:$0xff]
        %v329 = vld [vmem:[#allocation2 + $0x38] sm:$0xff]
        %v330 = vmul.f32 %v322, 0.00390625
        %v331 = vmul.f32 %v323, 0.00390625
        %v332 = vmul.f32 %v324, 0.00390625
        %v333 = vmul.f32 %v325, 0.00390625
        %v334 = vmul.f32 %v326, 0.00390625
        %v335 = vmul.f32 %v327, 0.00390625
        %v336 = vmul.f32 %v328, 0.00390625
        %v337 = vmul.f32 %v329, 0.00390625
        %338 = vst.msk [vmem:[%s179] sm:$0xff] %vm262, %v330
        %339 = vst.msk [vmem:[%s179 + $0x8] sm:$0xff] %vm262, %v331
        %340 = vst.msk [vmem:[%s179 + $0x10] sm:$0xff] %vm262, %v332
        %341 = vst.msk [vmem:[%s179 + $0x18] sm:$0xff] %vm262, %v333
        %342 = vst.msk [vmem:[%s179 + $0x20] sm:$0xff] %vm262, %v334
        %343 = vst.msk [vmem:[%s179 + $0x28] sm:$0xff] %vm262, %v335
        %344 = vst.msk [vmem:[%s179 + $0x30] sm:$0xff] %vm262, %v336
        %345 = vst.msk [vmem:[%s179 + $0x38] sm:$0xff] %vm262, %v337
        %v346 = vld [vmem:[#allocation3] sm:$0xff]
        %v347 = vld [vmem:[#allocation3 + $0x8] sm:$0xff]
        %v348 = vld [vmem:[#allocation3 + $0x10] sm:$0xff]
        %v349 = vld [vmem:[#allocation3 + $0x18] sm:$0xff]
        %v350 = vld [vmem:[#allocation3 + $0x20] sm:$0xff]
        %v351 = vld [vmem:[#allocation3 + $0x28] sm:$0xff]
        %v352 = vld [vmem:[#allocation3 + $0x30] sm:$0xff]
        %v353 = vld [vmem:[#allocation3 + $0x38] sm:$0xff]
        %354 = vst.msk [vmem:[%s184] sm:$0xff] %vm262, %v346
        %355 = vst.msk [vmem:[%s184 + $0x8] sm:$0xff] %vm262, %v347
        %356 = vst.msk [vmem:[%s184 + $0x10] sm:$0xff] %vm262, %v348
        %357 = vst.msk [vmem:[%s184 + $0x18] sm:$0xff] %vm262, %v349
        %358 = vst.msk [vmem:[%s184 + $0x20] sm:$0xff] %vm262, %v350
        %359 = vst.msk [vmem:[%s184 + $0x28] sm:$0xff] %vm262, %v351
        %360 = vst.msk [vmem:[%s184 + $0x30] sm:$0xff] %vm262, %v352
        %361 = vst.msk [vmem:[%s184 + $0x38] sm:$0xff] %vm262, %v353
      $region32: #{cbam_forward.4} parent=23 // pred_fallthru
        _
      %p362 = scmp.lt.s32.totalorder %s18, 1
      %s363 = scalar_select %p362, %s18, 1
      %s364 = smul.addr %s363, 8
      %s365 = smul.addr %s364, 8
      %s366 = scalar_lea.vmem %s1, %s365
      %p367 = scmp.lt.s32.totalorder %s18, 1
      %s368 = scalar_select %p367, %s18, 1
      %s369 = smul.addr %s368, 8
      %s370 = smul.addr %s369, 8
      %s371 = scalar_lea.vmem %s2, %s370
      // Predicated region
      $region33: #{cbam_forward.4} parent=23 // pred_check
        %p372 = pneg %p72
      $region34: #{cbam_forward.4} parent=23 // pred_check_branch
        %374 = sbr.rel (%p372) target = $region36
      $region35: #{cbam_forward.4} parent=23 // pred_region
        _
      $region36: #{cbam_forward.4} parent=23 // pred_fallthru
        _
      // Predicated region
      $region37: #{cbam_forward.4} parent=23 // pred_check
        %p375 = pneg %p98
      $region38: #{cbam_forward.4} parent=23 // pred_check_branch
        %377 = sbr.rel (%p375) target = $region40
      $region39: #{cbam_forward.4} parent=23 // pred_region
        _
      $region40: #{cbam_forward.4} parent=23 // pred_fallthru
        _
    $region24: #{cbam_forward.4} parent=5 // pred_fallthru
      _
    %p378 = scmp.le.s32.totalorder 2, %s9
    // Predicated region
    $region41: #{cbam_forward.4} parent=5 // pred_check
      %p379 = pneg %p378
    $region42: #{cbam_forward.4} parent=5 // pred_check_branch
      %381 = sbr.rel (%p379) target = $region44
    $region43: #{cbam_forward.4} parent=5 // pred_region
      %s382 = ssub.s32 %s9, 2
      // Predicated region
      $region45: #{cbam_forward.4} parent=43 // pred_check
        %p383 = pneg %p78
      $region46: #{cbam_forward.4} parent=43 // pred_check_branch
        %385 = sbr.rel (%p383) target = $region48
      $region47: #{cbam_forward.4} parent=43 // pred_region
        %p386 = scmp.lt.s32.totalorder %s20, 1
        %s387 = scalar_select %p386, %s20, 1
        %s388 = smul.addr %s387, 8
        %s389 = smul.addr %s388, 8
        %s390 = scalar_lea.vmem %s1, %s389
      $region48: #{cbam_forward.4} parent=43 // pred_fallthru
        _
      // Predicated region
      $region49: #{cbam_forward.4} parent=43 // pred_check
        %p391 = pneg %p104
      $region50: #{cbam_forward.4} parent=43 // pred_check_branch
        %393 = sbr.rel (%p391) target = $region52
      $region51: #{cbam_forward.4} parent=43 // pred_region
        %p394 = scmp.lt.s32.totalorder %s20, 1
        %s395 = scalar_select %p394, %s20, 1
        %s396 = smul.addr %s395, 8
        %s397 = smul.addr %s396, 8
        %s398 = scalar_lea.vmem %s2, %s397
      $region52: #{cbam_forward.4} parent=43 // pred_fallthru
        _
    $region44: #{cbam_forward.4} parent=5 // pred_fallthru
      _
  $region6: #{cbam_forward.4} parent=0 // loop_footer
    %s13 = sadd.s32 1, %s9
  $region7: #{cbam_forward.4} parent=0 // loop_footer_branch
    %8 = sbr.rel target = $region3
  $region8: #{cbam_forward.4} parent=0 // loop_exit
    _

// kernel: cbam_forward.6
$region0: #{cbam_forward.6}
  #allocation0 [shape = 'u32[]', space=smem, size = 0x4, offset = 0x4, fixed_abs, tag = 'smem constant byte address 0x4 - core index']
  #allocation1 [shape = 'u32[144,128]{1,0:T(1,128)}', space=vmem, size = 0x12000, scoped, tag = 'internal scratch']
  %s0 = inlined_call_operand.vmem [shape: f32[2,64,256], index: 0, kind: input, shape index: {}]
  %s1 = inlined_call_operand.vmem [shape: f32[2,64,1], index: 1, kind: input, shape index: {}]
  %s2 = inlined_call_operand.vmem [shape: f32[2,2,256], index: 2, kind: output, shape index: {}]
  %s3 = sld [smem:[#allocation0]]
  $region41: #{cbam_forward.6} parent=0
    _
  %s5 = ssub.s32 1, %s3
  %s6 = scalar_select 0, %s5, %s3
  loop: start=0, step=1, limit=4
  $region2: #{cbam_forward.6} parent=0 // loop_pre_header
    _
  $region3: #{cbam_forward.6} parent=0 // loop_header
    %s8 = sphi 0, %s12
    %p9 = scmp.ge.s32.totalorder %s8, 4
    %s15 = sphi 0, %s27
    %s16 = sphi 0, %s23
    %s17 = sphi 0, %s15
    %s18 = sphi 0, %s16
    %s19 = sphi 0, %s17
    %s20 = sphi 0, %s18
    %s32 = sphi 0, %s34
    %s35 = sphi 0, %s32
    %s36 = sphi 0, %s35
    %s52 = sphi 0, %s36
    %s58 = sphi 0, %s60
    %s61 = sphi 0, %s58
    %s62 = sphi 0, %s61
    %s78 = sphi 0, %s62
    %s86 = sphi 0, %s88
    %s89 = sphi 0, %s86
    %s90 = sphi 0, %s89
    %s106 = sphi 0, %s90
  $region4: #{cbam_forward.6} parent=0 // loop_header_branch
    %11 = sbr.rel (%p9) target = $region8
  $region5: #{cbam_forward.6} parent=0 // loop_body
    %s13 = ssub.s32 %s8, 1
    %s14 = ssub.s32 %s8, 2
    %s21 = sadd.s32 1, %s16
    %p22 = scmp.ge.s32.totalorder %s21, 1
    %s23 = scalar_select %p22, 0, %s21
    %s24 = sadd.s32 1, %s15
    %s25 = scalar_select %p22, %s24, %s15
    %p26 = scmp.ge.s32.totalorder %s25, 2
    %s27 = scalar_select %p26, 0, %s25
    %s28 = ssub.s32 %s15, %s27
    %s29 = ssub.s32 %s16, %s23
    %s30 = sor.u32 %s28, %s29
    %p31 = scmp.eq.s32.totalorder %s30, 0
    %s33 = sadd.s32 %s32, 1
    %s34 = scalar_select %p31, %s32, %s33
    %p37 = pneg %p31
    %p38 = scmp.eq.s32.totalorder %s8, 1
    %p39 = por %p37, %p38
    %p40 = scmp.ne.s32.totalorder %s32, %s35
    %p41 = scmp.eq.s32.totalorder %s8, 0
    %p42 = por %p40, %p41
    %p43 = scmp.ne.s32.totalorder %s32, %s35
    %p44 = scmp.eq.s32.totalorder %s13, 1
    %p45 = por %p43, %p44
    %p46 = scmp.ne.s32.totalorder %s35, %s36
    %p47 = scmp.eq.s32.totalorder %s13, 0
    %p48 = por %p46, %p47
    %p49 = scmp.ne.s32.totalorder %s35, %s36
    %p50 = scmp.eq.s32.totalorder %s14, 1
    %p51 = por %p49, %p50
    %p53 = scmp.ne.s32.totalorder %s36, %s52
    %p54 = scmp.eq.s32.totalorder %s14, 0
    %p55 = por %p53, %p54
    %s56 = ssub.s32 %s15, %s27
    %p57 = scmp.eq.s32.totalorder %s56, 0
    %s59 = sadd.s32 %s58, 1
    %s60 = scalar_select %p57, %s58, %s59
    %p63 = pneg %p57
    %p64 = scmp.eq.s32.totalorder %s8, 1
    %p65 = por %p63, %p64
    %p66 = scmp.ne.s32.totalorder %s58, %s61
    %p67 = scmp.eq.s32.totalorder %s8, 0
    %p68 = por %p66, %p67
    %p69 = scmp.ne.s32.totalorder %s58, %s61
    %p70 = scmp.eq.s32.totalorder %s13, 1
    %p71 = por %p69, %p70
    %p72 = scmp.ne.s32.totalorder %s61, %s62
    %p73 = scmp.eq.s32.totalorder %s13, 0
    %p74 = por %p72, %p73
    %p75 = scmp.ne.s32.totalorder %s61, %s62
    %p76 = scmp.eq.s32.totalorder %s14, 1
    %p77 = por %p75, %p76
    %p79 = scmp.ne.s32.totalorder %s62, %s78
    %p80 = scmp.eq.s32.totalorder %s14, 0
    %p81 = por %p79, %p80
    %s82 = ssub.s32 %s15, %s27
    %s83 = ssub.s32 %s16, %s23
    %s84 = sor.u32 %s82, %s83
    %p85 = scmp.eq.s32.totalorder %s84, 0
    %s87 = sadd.s32 %s86, 1
    %s88 = scalar_select %p85, %s86, %s87
    %p91 = pneg %p85
    %p92 = scmp.eq.s32.totalorder %s8, 1
    %p93 = por %p91, %p92
    %p94 = scmp.ne.s32.totalorder %s86, %s89
    %p95 = scmp.eq.s32.totalorder %s8, 0
    %p96 = por %p94, %p95
    %p97 = scmp.ne.s32.totalorder %s86, %s89
    %p98 = scmp.eq.s32.totalorder %s13, 1
    %p99 = por %p97, %p98
    %p100 = scmp.ne.s32.totalorder %s89, %s90
    %p101 = scmp.eq.s32.totalorder %s13, 0
    %p102 = por %p100, %p101
    %p103 = scmp.ne.s32.totalorder %s89, %s90
    %p104 = scmp.eq.s32.totalorder %s14, 1
    %p105 = por %p103, %p104
    %p107 = scmp.ne.s32.totalorder %s90, %s106
    %p108 = scmp.eq.s32.totalorder %s14, 0
    %p109 = por %p107, %p108
    %p110 = scmp.le.s32.totalorder 1, %s8
    %p111 = scmp.lt.s32.totalorder %s8, 3
    %p112 = pnand %p110, %p111
    %p113 = pneg %p112
    // Predicated region
    $region9: #{cbam_forward.6} parent=5 // pred_check
      _
    $region10: #{cbam_forward.6} parent=5 // pred_check_branch
      %115 = sbr.rel (%p112) target = $region12
    $region11: #{cbam_forward.6} parent=5 // pred_region
      %s116 = ssub.s32 %s8, 1
    $region12: #{cbam_forward.6} parent=5 // pred_fallthru
      _
    %p117 = scmp.lt.s32.totalorder %s8, 2
    // Predicated region
    $region13: #{cbam_forward.6} parent=5 // pred_check
      %p118 = pneg %p117
    $region14: #{cbam_forward.6} parent=5 // pred_check_branch
      %120 = sbr.rel (%p118) target = $region16
    $region15: #{cbam_forward.6} parent=5 // pred_region
      // Predicated region
      $region17: #{cbam_forward.6} parent=15 // pred_check
        %p121 = pneg %p42
      $region18: #{cbam_forward.6} parent=15 // pred_check_branch
        %123 = sbr.rel (%p121) target = $region20
      $region19: #{cbam_forward.6} parent=15 // pred_region
        %s124 = smul.u32 2, %s16
        %p125 = scmp.lt.s32.totalorder %s15, 1
        %s126 = scalar_select %p125, %s15, 1
        %p127 = scmp.lt.s32.totalorder %s124, 1
        %s128 = scalar_select %p127, %s124, 1
        %s129 = smul.addr %s126, 16
        %s130 = sadd.s32 %s128, %s129
        %s131 = smul.addr %s130, 8
        %s132 = scalar_lea.vmem %s0, %s131
        %s133 = smul.u32 2, %s16
      $region20: #{cbam_forward.6} parent=15 // pred_fallthru
        _
      // Predicated region
      $region21: #{cbam_forward.6} parent=15 // pred_check
        %p134 = pneg %p68
      $region22: #{cbam_forward.6} parent=15 // pred_check_branch
        %136 = sbr.rel (%p134) target = $region24
      $region23: #{cbam_forward.6} parent=15 // pred_region
        %p137 = scmp.lt.s32.totalorder %s15, 1
        %s138 = scalar_select %p137, %s15, 1
        %s139 = smul.addr %s138, 8
        %s140 = smul.addr %s139, 8
        %s141 = scalar_lea.vmem %s1, %s140
      $region24: #{cbam_forward.6} parent=15 // pred_fallthru
        _
    $region16: #{cbam_forward.6} parent=5 // pred_fallthru
      _
    %p142 = scmp.le.s32.totalorder 1, %s8
    %p143 = scmp.lt.s32.totalorder %s8, 3
    %p144 = pnand %p142, %p143
    %p145 = pneg %p144
    // Predicated region
    $region25: #{cbam_forward.6} parent=5 // pred_check
      _
    $region26: #{cbam_forward.6} parent=5 // pred_check_branch
      %147 = sbr.rel (%p144) target = $region28
    $region27: #{cbam_forward.6} parent=5 // pred_region
      %s148 = ssub.s32 %s8, 1
      %s149 = smul.u32 2, %s18
      %p150 = scmp.lt.s32.totalorder %s17, 1
      %s151 = scalar_select %p150, %s17, 1
      %p152 = scmp.lt.s32.totalorder %s149, 1
      %s153 = scalar_select %p152, %s149, 1
      %s154 = smul.addr %s151, 16
      %s155 = sadd.s32 %s153, %s154
      %s156 = smul.addr %s155, 8
      %s157 = scalar_lea.vmem %s0, %s156
      %p158 = pneg %p48
      %p159 = pneg %p45
      %p160 = scmp.lt.s32.totalorder %s17, 1
      %s161 = scalar_select %p160, %s17, 1
      %s162 = smul.addr %s161, 8
      %s163 = smul.addr %s162, 8
      %s164 = scalar_lea.vmem %s1, %s163
      %p165 = pneg %p74
      %p166 = pneg %p71
      %p167 = pneg %p102
      %p168 = pneg %p99
      %s169 = smul.u32 2, %s18
      %p170 = scmp.lt.s32.totalorder %s17, 1
      %s171 = scalar_select %p170, %s17, 1
      %p172 = scmp.lt.s32.totalorder %s169, 1
      %s173 = scalar_select %p172, %s169, 1
      %s174 = smul.addr %s171, 2
      %s175 = sadd.s32 %s173, %s174
      %s176 = smul.addr %s175, 2
      %s177 = scalar_lea.vmem %s2, %s176
      %s178 = smul.u32 2, %s18
      %p179 = scmp.lt.s32.totalorder %s17, 1
      %s180 = scalar_select %p179, %s17, 1
      %p181 = scmp.lt.s32.totalorder %s178, 1
      %s182 = scalar_select %p181, %s178, 1
      %s183 = smul.addr %s180, 16
      %s184 = sadd.s32 %s182, %s183
      %s185 = smul.addr %s184, 8
      %s186 = scalar_lea.vmem %s0, %s185
      %s187 = smul.u32 2, %s18
      %p188 = scmp.lt.s32.totalorder %s17, 1
      %s189 = scalar_select %p188, %s17, 1
      %s190 = smul.addr %s189, 8
      %s191 = smul.addr %s190, 8
      %s192 = scalar_lea.vmem %s1, %s191
      %s193 = smul.u32 2, %s18
      %p194 = scmp.lt.s32.totalorder %s17, 1
      %s195 = scalar_select %p194, %s17, 1
      %p196 = scmp.lt.s32.totalorder %s193, 1
      %s197 = scalar_select %p196, %s193, 1
      %s198 = smul.addr %s195, 2
      %s199 = sadd.s32 %s197, %s198
      %s200 = smul.addr %s199, 2
      %s201 = scalar_lea.vmem %s2, %s200
      %s202 = smul.u32 2, %s18
      %v203 = vld [vmem:[%s186] sm:$0xff]
      %v204 = vld [vmem:[%s186 + $0x8] sm:$0xff]
      %v205 = vld [vmem:[%s186 + $0x10] sm:$0xff]
      %v206 = vld [vmem:[%s186 + $0x18] sm:$0xff]
      %v207 = vld [vmem:[%s186 + $0x20] sm:$0xff]
      %v208 = vld [vmem:[%s186 + $0x28] sm:$0xff]
      %v209 = vld [vmem:[%s186 + $0x30] sm:$0xff]
      %v210 = vld [vmem:[%s186 + $0x38] sm:$0xff]
      %v211 = vld [vmem:[%s186 + $0x40] sm:$0xff]
      %v212 = vld [vmem:[%s186 + $0x48] sm:$0xff]
      %v213 = vld [vmem:[%s186 + $0x50] sm:$0xff]
      %v214 = vld [vmem:[%s186 + $0x58] sm:$0xff]
      %v215 = vld [vmem:[%s186 + $0x60] sm:$0xff]
      %v216 = vld [vmem:[%s186 + $0x68] sm:$0xff]
      %v217 = vld [vmem:[%s186 + $0x70] sm:$0xff]
      %v218 = vld [vmem:[%s186 + $0x78] sm:$0xff]
      %v219 = vld [vmem:[%s192] sm:$0xff]
      %v220 = vld [vmem:[%s192 + $0x8] sm:$0xff]
      %v221 = vld [vmem:[%s192 + $0x10] sm:$0xff]
      %v222 = vld [vmem:[%s192 + $0x18] sm:$0xff]
      %v223 = vld [vmem:[%s192 + $0x20] sm:$0xff]
      %v224 = vld [vmem:[%s192 + $0x28] sm:$0xff]
      %v225 = vld [vmem:[%s192 + $0x30] sm:$0xff]
      %v226 = vld [vmem:[%s192 + $0x38] sm:$0xff]
      %228 = vset.pattern.permute.xlu0 0
      %229 = vperm.xlu0 %228, %v219
      %v230 = vpop.permute.xlu0 %229
      %233 = vset.pattern.permute.xlu0 0
      %234 = vperm.xlu0 %233, %v220
      %v235 = vpop.permute.xlu0 %234
      %238 = vset.pattern.permute.xlu0 0
      %239 = vperm.xlu0 %238, %v221
      %v240 = vpop.permute.xlu0 %239
      %243 = vset.pattern.permute.xlu0 0
      %244 = vperm.xlu0 %243, %v222
      %v245 = vpop.permute.xlu0 %244
      %248 = vset.pattern.permute.xlu0 0
      %249 = vperm.xlu0 %248, %v223
      %v250 = vpop.permute.xlu0 %249
      %253 = vset.pattern.permute.xlu0 0
      %254 = vperm.xlu0 %253, %v224
      %v255 = vpop.permute.xlu0 %254
      %258 = vset.pattern.permute.xlu0 0
      %259 = vperm.xlu0 %258, %v225
      %v260 = vpop.permute.xlu0 %259
      %263 = vset.pattern.permute.xlu0 0
      %264 = vperm.xlu0 %263, %v226
      %v265 = vpop.permute.xlu0 %264
      %v267 = vmul.f32 %v203, %v230
      %v268 = vmul.f32 %v204, %v230
      %v269 = vmul.f32 %v205, %v235
      %v270 = vmul.f32 %v206, %v235
      %v271 = vmul.f32 %v207, %v240
      %v272 = vmul.f32 %v208, %v240
      %v273 = vmul.f32 %v209, %v245
      %v274 = vmul.f32 %v210, %v245
      %v275 = vmul.f32 %v211, %v250
      %v276 = vmul.f32 %v212, %v250
      %v277 = vmul.f32 %v213, %v255
      %v278 = vmul.f32 %v214, %v255
      %v279 = vmul.f32 %v215, %v260
      %v280 = vmul.f32 %v216, %v260
      %v281 = vmul.f32 %v217, %v265
      %v282 = vmul.f32 %v218, %v265
      %v283 = vadd.f32 %v267, %v269
      %v284 = vadd.f32 %v283, %v271
      %v285 = vadd.f32 %v284, %v273
      %v286 = vadd.f32 %v285, %v275
      %v287 = vadd.f32 %v286, %v277
      %v288 = vadd.f32 %v287, %v279
      %v289 = vadd.f32 %v288, %v281
      %v290 = vrot.slane %v289, 4
      %v291 = vadd.f32 %v289, %v290
      %v292 = vrot.slane %v291, 2
      %v293 = vadd.f32 %v291, %v292
      %v294 = vrot.slane %v293, 1
      %v295 = vadd.f32 %v293, %v294
      %v296 = vadd.f32 %v268, %v270
      %v297 = vadd.f32 %v296, %v272
      %v298 = vadd.f32 %v297, %v274
      %v299 = vadd.f32 %v298, %v276
      %v300 = vadd.f32 %v299, %v278
      %v301 = vadd.f32 %v300, %v280
      %v302 = vadd.f32 %v301, %v282
      %v303 = vrot.slane %v302, 4
      %v304 = vadd.f32 %v302, %v303
      %v305 = vrot.slane %v304, 2
      %v306 = vadd.f32 %v304, %v305
      %v307 = vrot.slane %v306, 1
      %v308 = vadd.f32 %v306, %v307
      %v309 = vmul.f32 %v295, 0.015625
      %v310 = vmul.f32 %v308, 0.015625
      %v311 = vmax.f32 %v267, %v271
      %v312 = vmax.f32 %v269, %v273
      %v313 = vmax.f32 %v311, %v275
      %v314 = vmax.f32 %v312, %v277
      %v315 = vmax.f32 %v313, %v279
      %v316 = vmax.f32 %v314, %v281
      %v317 = vmax.f32 %v315, %v316
      %v318 = vrot.slane %v317, 4
      %v319 = vmax.f32 %v317, %v318
      %v320 = vrot.slane %v319, 2
      %v321 = vmax.f32 %v319, %v320
      %v322 = vrot.slane %v321, 1
      %v323 = vmax.f32 %v321, %v322
      %v324 = vmax.f32 %v268, %v272
      %v325 = vmax.f32 %v270, %v274
      %v326 = vmax.f32 %v324, %v276
      %v327 = vmax.f32 %v325, %v278
      %v328 = vmax.f32 %v326, %v280
      %v329 = vmax.f32 %v327, %v282
      %v330 = vmax.f32 %v328, %v329
      %v331 = vrot.slane %v330, 4
      %v332 = vmax.f32 %v330, %v331
      %v333 = vrot.slane %v332, 2
      %v334 = vmax.f32 %v332, %v333
      %v335 = vrot.slane %v334, 1
      %v336 = vmax.f32 %v334, %v335
      %vm337 = vcmask 1040384
      %v338 = vsel %vm337, %v309, %v323
      %v339 = vsel %vm337, %v310, %v336
      %v342 = vcombine.low %v338, %v339
      %v344 = vunpack.c.l.s4 1983009808
      %v345 = vunpack.c.0.s8 %v344
      %v346 = vlaneseq
      %v347 = vshrl.u32 %v346, 7
      %v348 = vsub.s32 %v345, %v347
      %v349 = vrot.slane %v342, %v348
      %351 = vst [vmem:[%s201] sm:$0xf] %v349
      %s352 = smul.u32 2, %s18
      %p353 = scmp.lt.s32.totalorder %s17, 1
      %s354 = scalar_select %p353, %s17, 1
      %p355 = scmp.lt.s32.totalorder %s352, 1
      %s356 = scalar_select %p355, %s352, 1
      %s357 = smul.addr %s354, 2
      %s358 = sadd.s32 %s356, %s357
      %s359 = smul.addr %s358, 2
      %s360 = scalar_lea.vmem %s2, %s359
      // Predicated region
      $region29: #{cbam_forward.6} parent=27 // pred_check
        %p361 = pneg %p99
      $region30: #{cbam_forward.6} parent=27 // pred_check_branch
        %363 = sbr.rel (%p361) target = $region32
      $region31: #{cbam_forward.6} parent=27 // pred_region
        %s364 = smul.u32 2, %s18
      $region32: #{cbam_forward.6} parent=27 // pred_fallthru
        _
    $region28: #{cbam_forward.6} parent=5 // pred_fallthru
      _
    %p365 = scmp.le.s32.totalorder 2, %s8
    // Predicated region
    $region33: #{cbam_forward.6} parent=5 // pred_check
      %p366 = pneg %p365
    $region34: #{cbam_forward.6} parent=5 // pred_check_branch
      %368 = sbr.rel (%p366) target = $region36
    $region35: #{cbam_forward.6} parent=5 // pred_region
      %s369 = ssub.s32 %s8, 2
      // Predicated region
      $region37: #{cbam_forward.6} parent=35 // pred_check
        %p370 = pneg %p105
      $region38: #{cbam_forward.6} parent=35 // pred_check_branch
        %372 = sbr.rel (%p370) target = $region40
      $region39: #{cbam_forward.6} parent=35 // pred_region
        %s373 = smul.u32 2, %s20
        %p374 = scmp.lt.s32.totalorder %s19, 1
        %s375 = scalar_select %p374, %s19, 1
        %p376 = scmp.lt.s32.totalorder %s373, 1
        %s377 = scalar_select %p376, %s373, 1
        %s378 = smul.addr %s375, 2
        %s379 = sadd.s32 %s377, %s378
        %s380 = smul.addr %s379, 2
        %s381 = scalar_lea.vmem %s2, %s380
      $region40: #{cbam_forward.6} parent=35 // pred_fallthru
        _
    $region36: #{cbam_forward.6} parent=5 // pred_fallthru
      _
  $region6: #{cbam_forward.6} parent=0 // loop_footer
    %s12 = sadd.s32 1, %s8
  $region7: #{cbam_forward.6} parent=0 // loop_footer_branch
    %7 = sbr.rel target = $region3
  $region8: #{cbam_forward.6} parent=0 // loop_exit
    _

// kernel: cbam_forward.7
$region0: #{cbam_forward.7}
  #allocation0 [shape = 'u32[]', space=smem, size = 0x4, offset = 0x4, fixed_abs, tag = 'smem constant byte address 0x4 - core index']
  #allocation1 [shape = 'u32[144,128]{1,0:T(1,128)}', space=vmem, size = 0x12000, scoped, tag = 'internal scratch']
  %s0 = inlined_call_operand.vmem [shape: f32[2,64,256], index: 0, kind: input, shape index: {}]
  %s1 = inlined_call_operand.vmem [shape: f32[2,64,1], index: 1, kind: input, shape index: {}]
  %s2 = inlined_call_operand.vmem [shape: f32[2,1,256], index: 2, kind: input, shape index: {}]
  %s3 = inlined_call_operand.vmem [shape: f32[2,64,256], index: 3, kind: output, shape index: {}]
  %s4 = sld [smem:[#allocation0]]
  $region45: #{cbam_forward.7} parent=0
    _
  %s6 = ssub.s32 1, %s4
  %s7 = scalar_select 0, %s6, %s4
  loop: start=0, step=1, limit=4
  $region2: #{cbam_forward.7} parent=0 // loop_pre_header
    _
  $region3: #{cbam_forward.7} parent=0 // loop_header
    %s9 = sphi 0, %s13
    %p10 = scmp.ge.s32.totalorder %s9, 4
    %s16 = sphi 0, %s28
    %s17 = sphi 0, %s24
    %s18 = sphi 0, %s16
    %s19 = sphi 0, %s17
    %s20 = sphi 0, %s18
    %s21 = sphi 0, %s19
    %s33 = sphi 0, %s35
    %s36 = sphi 0, %s33
    %s37 = sphi 0, %s36
    %s53 = sphi 0, %s37
    %s59 = sphi 0, %s61
    %s62 = sphi 0, %s59
    %s63 = sphi 0, %s62
    %s79 = sphi 0, %s63
    %s87 = sphi 0, %s89
    %s90 = sphi 0, %s87
    %s91 = sphi 0, %s90
    %s107 = sphi 0, %s91
    %s115 = sphi 0, %s117
    %s118 = sphi 0, %s115
    %s119 = sphi 0, %s118
    %s135 = sphi 0, %s119
  $region4: #{cbam_forward.7} parent=0 // loop_header_branch
    %12 = sbr.rel (%p10) target = $region8
  $region5: #{cbam_forward.7} parent=0 // loop_body
    %s14 = ssub.s32 %s9, 1
    %s15 = ssub.s32 %s9, 2
    %s22 = sadd.s32 1, %s17
    %p23 = scmp.ge.s32.totalorder %s22, 1
    %s24 = scalar_select %p23, 0, %s22
    %s25 = sadd.s32 1, %s16
    %s26 = scalar_select %p23, %s25, %s16
    %p27 = scmp.ge.s32.totalorder %s26, 2
    %s28 = scalar_select %p27, 0, %s26
    %s29 = ssub.s32 %s16, %s28
    %s30 = ssub.s32 %s17, %s24
    %s31 = sor.u32 %s29, %s30
    %p32 = scmp.eq.s32.totalorder %s31, 0
    %s34 = sadd.s32 %s33, 1
    %s35 = scalar_select %p32, %s33, %s34
    %p38 = pneg %p32
    %p39 = scmp.eq.s32.totalorder %s9, 1
    %p40 = por %p38, %p39
    %p41 = scmp.ne.s32.totalorder %s33, %s36
    %p42 = scmp.eq.s32.totalorder %s9, 0
    %p43 = por %p41, %p42
    %p44 = scmp.ne.s32.totalorder %s33, %s36
    %p45 = scmp.eq.s32.totalorder %s14, 1
    %p46 = por %p44, %p45
    %p47 = scmp.ne.s32.totalorder %s36, %s37
    %p48 = scmp.eq.s32.totalorder %s14, 0
    %p49 = por %p47, %p48
    %p50 = scmp.ne.s32.totalorder %s36, %s37
    %p51 = scmp.eq.s32.totalorder %s15, 1
    %p52 = por %p50, %p51
    %p54 = scmp.ne.s32.totalorder %s37, %s53
    %p55 = scmp.eq.s32.totalorder %s15, 0
    %p56 = por %p54, %p55
    %s57 = ssub.s32 %s16, %s28
    %p58 = scmp.eq.s32.totalorder %s57, 0
    %s60 = sadd.s32 %s59, 1
    %s61 = scalar_select %p58, %s59, %s60
    %p64 = pneg %p58
    %p65 = scmp.eq.s32.totalorder %s9, 1
    %p66 = por %p64, %p65
    %p67 = scmp.ne.s32.totalorder %s59, %s62
    %p68 = scmp.eq.s32.totalorder %s9, 0
    %p69 = por %p67, %p68
    %p70 = scmp.ne.s32.totalorder %s59, %s62
    %p71 = scmp.eq.s32.totalorder %s14, 1
    %p72 = por %p70, %p71
    %p73 = scmp.ne.s32.totalorder %s62, %s63
    %p74 = scmp.eq.s32.totalorder %s14, 0
    %p75 = por %p73, %p74
    %p76 = scmp.ne.s32.totalorder %s62, %s63
    %p77 = scmp.eq.s32.totalorder %s15, 1
    %p78 = por %p76, %p77
    %p80 = scmp.ne.s32.totalorder %s63, %s79
    %p81 = scmp.eq.s32.totalorder %s15, 0
    %p82 = por %p80, %p81
    %s83 = ssub.s32 %s16, %s28
    %s84 = ssub.s32 %s17, %s24
    %s85 = sor.u32 %s83, %s84
    %p86 = scmp.eq.s32.totalorder %s85, 0
    %s88 = sadd.s32 %s87, 1
    %s89 = scalar_select %p86, %s87, %s88
    %p92 = pneg %p86
    %p93 = scmp.eq.s32.totalorder %s9, 1
    %p94 = por %p92, %p93
    %p95 = scmp.ne.s32.totalorder %s87, %s90
    %p96 = scmp.eq.s32.totalorder %s9, 0
    %p97 = por %p95, %p96
    %p98 = scmp.ne.s32.totalorder %s87, %s90
    %p99 = scmp.eq.s32.totalorder %s14, 1
    %p100 = por %p98, %p99
    %p101 = scmp.ne.s32.totalorder %s90, %s91
    %p102 = scmp.eq.s32.totalorder %s14, 0
    %p103 = por %p101, %p102
    %p104 = scmp.ne.s32.totalorder %s90, %s91
    %p105 = scmp.eq.s32.totalorder %s15, 1
    %p106 = por %p104, %p105
    %p108 = scmp.ne.s32.totalorder %s91, %s107
    %p109 = scmp.eq.s32.totalorder %s15, 0
    %p110 = por %p108, %p109
    %s111 = ssub.s32 %s16, %s28
    %s112 = ssub.s32 %s17, %s24
    %s113 = sor.u32 %s111, %s112
    %p114 = scmp.eq.s32.totalorder %s113, 0
    %s116 = sadd.s32 %s115, 1
    %s117 = scalar_select %p114, %s115, %s116
    %p120 = pneg %p114
    %p121 = scmp.eq.s32.totalorder %s9, 1
    %p122 = por %p120, %p121
    %p123 = scmp.ne.s32.totalorder %s115, %s118
    %p124 = scmp.eq.s32.totalorder %s9, 0
    %p125 = por %p123, %p124
    %p126 = scmp.ne.s32.totalorder %s115, %s118
    %p127 = scmp.eq.s32.totalorder %s14, 1
    %p128 = por %p126, %p127
    %p129 = scmp.ne.s32.totalorder %s118, %s119
    %p130 = scmp.eq.s32.totalorder %s14, 0
    %p131 = por %p129, %p130
    %p132 = scmp.ne.s32.totalorder %s118, %s119
    %p133 = scmp.eq.s32.totalorder %s15, 1
    %p134 = por %p132, %p133
    %p136 = scmp.ne.s32.totalorder %s119, %s135
    %p137 = scmp.eq.s32.totalorder %s15, 0
    %p138 = por %p136, %p137
    %p139 = scmp.le.s32.totalorder 1, %s9
    %p140 = scmp.lt.s32.totalorder %s9, 3
    %p141 = pnand %p139, %p140
    %p142 = pneg %p141
    // Predicated region
    $region9: #{cbam_forward.7} parent=5 // pred_check
      _
    $region10: #{cbam_forward.7} parent=5 // pred_check_branch
      %144 = sbr.rel (%p141) target = $region12
    $region11: #{cbam_forward.7} parent=5 // pred_region
      %s145 = ssub.s32 %s9, 1
    $region12: #{cbam_forward.7} parent=5 // pred_fallthru
      _
    %p146 = scmp.lt.s32.totalorder %s9, 2
    // Predicated region
    $region13: #{cbam_forward.7} parent=5 // pred_check
      %p147 = pneg %p146
    $region14: #{cbam_forward.7} parent=5 // pred_check_branch
      %149 = sbr.rel (%p147) target = $region16
    $region15: #{cbam_forward.7} parent=5 // pred_region
      // Predicated region
      $region17: #{cbam_forward.7} parent=15 // pred_check
        %p150 = pneg %p43
      $region18: #{cbam_forward.7} parent=15 // pred_check_branch
        %152 = sbr.rel (%p150) target = $region20
      $region19: #{cbam_forward.7} parent=15 // pred_region
        %s153 = smul.u32 2, %s17
        %p154 = scmp.lt.s32.totalorder %s16, 1
        %s155 = scalar_select %p154, %s16, 1
        %p156 = scmp.lt.s32.totalorder %s153, 1
        %s157 = scalar_select %p156, %s153, 1
        %s158 = smul.addr %s155, 16
        %s159 = sadd.s32 %s157, %s158
        %s160 = smul.addr %s159, 8
        %s161 = scalar_lea.vmem %s0, %s160
        %s162 = smul.u32 2, %s17
      $region20: #{cbam_forward.7} parent=15 // pred_fallthru
        _
      // Predicated region
      $region21: #{cbam_forward.7} parent=15 // pred_check
        %p163 = pneg %p69
      $region22: #{cbam_forward.7} parent=15 // pred_check_branch
        %165 = sbr.rel (%p163) target = $region24
      $region23: #{cbam_forward.7} parent=15 // pred_region
        %p166 = scmp.lt.s32.totalorder %s16, 1
        %s167 = scalar_select %p166, %s16, 1
        %s168 = smul.addr %s167, 8
        %s169 = smul.addr %s168, 8
        %s170 = scalar_lea.vmem %s1, %s169
      $region24: #{cbam_forward.7} parent=15 // pred_fallthru
        _
      // Predicated region
      $region25: #{cbam_forward.7} parent=15 // pred_check
        %p171 = pneg %p97
      $region26: #{cbam_forward.7} parent=15 // pred_check_branch
        %173 = sbr.rel (%p171) target = $region28
      $region27: #{cbam_forward.7} parent=15 // pred_region
        %s174 = smul.u32 2, %s17
        %p175 = scmp.lt.s32.totalorder %s16, 1
        %s176 = scalar_select %p175, %s16, 1
        %p177 = scmp.lt.s32.totalorder %s174, 1
        %s178 = scalar_select %p177, %s174, 1
        %s179 = smul.addr %s176, 2
        %s180 = sadd.s32 %s178, %s179
        %s181 = scalar_lea.vmem %s2, %s180
        %s182 = smul.u32 2, %s17
      $region28: #{cbam_forward.7} parent=15 // pred_fallthru
        _
    $region16: #{cbam_forward.7} parent=5 // pred_fallthru
      _
    %p183 = scmp.le.s32.totalorder 1, %s9
    %p184 = scmp.lt.s32.totalorder %s9, 3
    %p185 = pnand %p183, %p184
    %p186 = pneg %p185
    // Predicated region
    $region29: #{cbam_forward.7} parent=5 // pred_check
      _
    $region30: #{cbam_forward.7} parent=5 // pred_check_branch
      %188 = sbr.rel (%p185) target = $region32
    $region31: #{cbam_forward.7} parent=5 // pred_region
      %s189 = ssub.s32 %s9, 1
      %s190 = smul.u32 2, %s19
      %p191 = scmp.lt.s32.totalorder %s18, 1
      %s192 = scalar_select %p191, %s18, 1
      %p193 = scmp.lt.s32.totalorder %s190, 1
      %s194 = scalar_select %p193, %s190, 1
      %s195 = smul.addr %s192, 16
      %s196 = sadd.s32 %s194, %s195
      %s197 = smul.addr %s196, 8
      %s198 = scalar_lea.vmem %s0, %s197
      %p199 = pneg %p49
      %p200 = pneg %p46
      %p201 = scmp.lt.s32.totalorder %s18, 1
      %s202 = scalar_select %p201, %s18, 1
      %s203 = smul.addr %s202, 8
      %s204 = smul.addr %s203, 8
      %s205 = scalar_lea.vmem %s1, %s204
      %p206 = pneg %p75
      %p207 = pneg %p72
      %s208 = smul.u32 2, %s19
      %p209 = scmp.lt.s32.totalorder %s18, 1
      %s210 = scalar_select %p209, %s18, 1
      %p211 = scmp.lt.s32.totalorder %s208, 1
      %s212 = scalar_select %p211, %s208, 1
      %s213 = smul.addr %s210, 2
      %s214 = sadd.s32 %s212, %s213
      %s215 = scalar_lea.vmem %s2, %s214
      %p216 = pneg %p103
      %p217 = pneg %p100
      %p218 = pneg %p131
      %p219 = pneg %p128
      %s220 = smul.u32 2, %s19
      %p221 = scmp.lt.s32.totalorder %s18, 1
      %s222 = scalar_select %p221, %s18, 1
      %p223 = scmp.lt.s32.totalorder %s220, 1
      %s224 = scalar_select %p223, %s220, 1
      %s225 = smul.addr %s222, 16
      %s226 = sadd.s32 %s224, %s225
      %s227 = smul.addr %s226, 8
      %s228 = scalar_lea.vmem %s3, %s227
      %s229 = smul.u32 2, %s19
      %p230 = scmp.lt.s32.totalorder %s18, 1
      %s231 = scalar_select %p230, %s18, 1
      %p232 = scmp.lt.s32.totalorder %s229, 1
      %s233 = scalar_select %p232, %s229, 1
      %s234 = smul.addr %s231, 16
      %s235 = sadd.s32 %s233, %s234
      %s236 = smul.addr %s235, 8
      %s237 = scalar_lea.vmem %s0, %s236
      %s238 = smul.u32 2, %s19
      %p239 = scmp.lt.s32.totalorder %s18, 1
      %s240 = scalar_select %p239, %s18, 1
      %s241 = smul.addr %s240, 8
      %s242 = smul.addr %s241, 8
      %s243 = scalar_lea.vmem %s1, %s242
      %s244 = smul.u32 2, %s19
      %p245 = scmp.lt.s32.totalorder %s18, 1
      %s246 = scalar_select %p245, %s18, 1
      %p247 = scmp.lt.s32.totalorder %s244, 1
      %s248 = scalar_select %p247, %s244, 1
      %s249 = smul.addr %s246, 2
      %s250 = sadd.s32 %s248, %s249
      %s251 = scalar_lea.vmem %s2, %s250
      %s252 = smul.u32 2, %s19
      %s253 = smul.u32 2, %s19
      %p254 = scmp.lt.s32.totalorder %s18, 1
      %s255 = scalar_select %p254, %s18, 1
      %p256 = scmp.lt.s32.totalorder %s253, 1
      %s257 = scalar_select %p256, %s253, 1
      %s258 = smul.addr %s255, 16
      %s259 = sadd.s32 %s257, %s258
      %s260 = smul.addr %s259, 8
      %s261 = scalar_lea.vmem %s3, %s260
      %s262 = smul.u32 2, %s19
      %v263 = vld [vmem:[%s237] sm:$0xff]
      %v264 = vld [vmem:[%s237 + $0x8] sm:$0xff]
      %v265 = vld [vmem:[%s237 + $0x10] sm:$0xff]
      %v266 = vld [vmem:[%s237 + $0x18] sm:$0xff]
      %v267 = vld [vmem:[%s237 + $0x20] sm:$0xff]
      %v268 = vld [vmem:[%s237 + $0x28] sm:$0xff]
      %v269 = vld [vmem:[%s237 + $0x30] sm:$0xff]
      %v270 = vld [vmem:[%s237 + $0x38] sm:$0xff]
      %v271 = vld [vmem:[%s237 + $0x40] sm:$0xff]
      %v272 = vld [vmem:[%s237 + $0x48] sm:$0xff]
      %v273 = vld [vmem:[%s237 + $0x50] sm:$0xff]
      %v274 = vld [vmem:[%s237 + $0x58] sm:$0xff]
      %v275 = vld [vmem:[%s237 + $0x60] sm:$0xff]
      %v276 = vld [vmem:[%s237 + $0x68] sm:$0xff]
      %v277 = vld [vmem:[%s237 + $0x70] sm:$0xff]
      %v278 = vld [vmem:[%s237 + $0x78] sm:$0xff]
      %v279 = vld [vmem:[%s243] sm:$0xff]
      %v280 = vld [vmem:[%s243 + $0x8] sm:$0xff]
      %v281 = vld [vmem:[%s243 + $0x10] sm:$0xff]
      %v282 = vld [vmem:[%s243 + $0x18] sm:$0xff]
      %v283 = vld [vmem:[%s243 + $0x20] sm:$0xff]
      %v284 = vld [vmem:[%s243 + $0x28] sm:$0xff]
      %v285 = vld [vmem:[%s243 + $0x30] sm:$0xff]
      %v286 = vld [vmem:[%s243 + $0x38] sm:$0xff]
      %v287 = vld [vmem:[%s251] sm:$0x3]
      %v288 = vsub.f32 0.0, %v287
      %v289 = vmul.f32 %v288, 1.442695
      %v290 = vpow.pop %v289
      %v291 = vadd.f32 %v290, 1.0
      %v292 = vrcp.pop %v291
      %294 = vset.pattern.permute.xlu0 0
      %295 = vperm.xlu0 %294, %v279
      %v296 = vpop.permute.xlu0 %295
      %299 = vset.pattern.permute.xlu0 0
      %300 = vperm.xlu0 %299, %v280
      %v301 = vpop.permute.xlu0 %300
      %304 = vset.pattern.permute.xlu0 0
      %305 = vperm.xlu0 %304, %v281
      %v306 = vpop.permute.xlu0 %305
      %309 = vset.pattern.permute.xlu0 0
      %310 = vperm.xlu0 %309, %v282
      %v311 = vpop.permute.xlu0 %310
      %314 = vset.pattern.permute.xlu0 0
      %315 = vperm.xlu0 %314, %v283
      %v316 = vpop.permute.xlu0 %315
      %319 = vset.pattern.permute.xlu0 0
      %320 = vperm.xlu0 %319, %v284
      %v321 = vpop.permute.xlu0 %320
      %324 = vset.pattern.permute.xlu0 0
      %325 = vperm.xlu0 %324, %v285
      %v326 = vpop.permute.xlu0 %325
      %329 = vset.pattern.permute.xlu0 0
      %330 = vperm.xlu0 %329, %v286
      %v331 = vpop.permute.xlu0 %330
      %v333 = vmul.f32 %v263, %v296
      %v334 = vmul.f32 %v264, %v296
      %v335 = vmul.f32 %v265, %v301
      %v336 = vmul.f32 %v266, %v301
      %v337 = vmul.f32 %v267, %v306
      %v338 = vmul.f32 %v268, %v306
      %v339 = vmul.f32 %v269, %v311
      %v340 = vmul.f32 %v270, %v311
      %v341 = vmul.f32 %v271, %v316
      %v342 = vmul.f32 %v272, %v316
      %v343 = vmul.f32 %v273, %v321
      %v344 = vmul.f32 %v274, %v321
      %v345 = vmul.f32 %v275, %v326
      %v346 = vmul.f32 %v276, %v326
      %v347 = vmul.f32 %v277, %v331
      %v348 = vmul.f32 %v278, %v331
      %v350 = vlaneseq
      %v351 = vshrl.u32 %v350, 7
      %v352 = vsub.s32 0, %v351
      %v353 = vrot.slane %v292, %v352
      %v354 = vlaneseq
      %v355 = vshrl.u32 %v354, 7
      %v356 = vsub.s32 1, %v355
      %v357 = vrot.slane %v292, %v356
      %v360 = vmul.f32 %v333, %v353
      %v361 = vmul.f32 %v334, %v357
      %v362 = vmul.f32 %v335, %v353
      %v363 = vmul.f32 %v336, %v357
      %v364 = vmul.f32 %v337, %v353
      %v365 = vmul.f32 %v338, %v357
      %v366 = vmul.f32 %v339, %v353
      %v367 = vmul.f32 %v340, %v357
      %v368 = vmul.f32 %v341, %v353
      %v369 = vmul.f32 %v342, %v357
      %v370 = vmul.f32 %v343, %v353
      %v371 = vmul.f32 %v344, %v357
      %v372 = vmul.f32 %v345, %v353
      %v373 = vmul.f32 %v346, %v357
      %v374 = vmul.f32 %v347, %v353
      %v375 = vmul.f32 %v348, %v357
      %376 = vst [vmem:[%s261] sm:$0xff] %v360
      %377 = vst [vmem:[%s261 + $0x8] sm:$0xff] %v361
      %378 = vst [vmem:[%s261 + $0x10] sm:$0xff] %v362
      %379 = vst [vmem:[%s261 + $0x18] sm:$0xff] %v363
      %380 = vst [vmem:[%s261 + $0x20] sm:$0xff] %v364
      %381 = vst [vmem:[%s261 + $0x28] sm:$0xff] %v365
      %382 = vst [vmem:[%s261 + $0x30] sm:$0xff] %v366
      %383 = vst [vmem:[%s261 + $0x38] sm:$0xff] %v367
      %384 = vst [vmem:[%s261 + $0x40] sm:$0xff] %v368
      %385 = vst [vmem:[%s261 + $0x48] sm:$0xff] %v369
      %386 = vst [vmem:[%s261 + $0x50] sm:$0xff] %v370
      %387 = vst [vmem:[%s261 + $0x58] sm:$0xff] %v371
      %388 = vst [vmem:[%s261 + $0x60] sm:$0xff] %v372
      %389 = vst [vmem:[%s261 + $0x68] sm:$0xff] %v373
      %390 = vst [vmem:[%s261 + $0x70] sm:$0xff] %v374
      %391 = vst [vmem:[%s261 + $0x78] sm:$0xff] %v375
      %s392 = smul.u32 2, %s19
      %p393 = scmp.lt.s32.totalorder %s18, 1
      %s394 = scalar_select %p393, %s18, 1
      %p395 = scmp.lt.s32.totalorder %s392, 1
      %s396 = scalar_select %p395, %s392, 1
      %s397 = smul.addr %s394, 16
      %s398 = sadd.s32 %s396, %s397
      %s399 = smul.addr %s398, 8
      %s400 = scalar_lea.vmem %s3, %s399
      // Predicated region
      $region33: #{cbam_forward.7} parent=31 // pred_check
        %p401 = pneg %p128
      $region34: #{cbam_forward.7} parent=31 // pred_check_branch
        %403 = sbr.rel (%p401) target = $region36
      $region35: #{cbam_forward.7} parent=31 // pred_region
        %s404 = smul.u32 2, %s19
      $region36: #{cbam_forward.7} parent=31 // pred_fallthru
        _
    $region32: #{cbam_forward.7} parent=5 // pred_fallthru
      _
    %p405 = scmp.le.s32.totalorder 2, %s9
    // Predicated region
    $region37: #{cbam_forward.7} parent=5 // pred_check
      %p406 = pneg %p405
    $region38: #{cbam_forward.7} parent=5 // pred_check_branch
      %408 = sbr.rel (%p406) target = $region40
    $region39: #{cbam_forward.7} parent=5 // pred_region
      %s409 = ssub.s32 %s9, 2
      // Predicated region
      $region41: #{cbam_forward.7} parent=39 // pred_check
        %p410 = pneg %p134
      $region42: #{cbam_forward.7} parent=39 // pred_check_branch
        %412 = sbr.rel (%p410) target = $region44
      $region43: #{cbam_forward.7} parent=39 // pred_region
        %s413 = smul.u32 2, %s21
        %p414 = scmp.lt.s32.totalorder %s20, 1
        %s415 = scalar_select %p414, %s20, 1
        %p416 = scmp.lt.s32.totalorder %s413, 1
        %s417 = scalar_select %p416, %s413, 1
        %s418 = smul.addr %s415, 16
        %s419 = sadd.s32 %s417, %s418
        %s420 = smul.addr %s419, 8
        %s421 = scalar_lea.vmem %s3, %s420
      $region44: #{cbam_forward.7} parent=39 // pred_fallthru
        _
    $region40: #{cbam_forward.7} parent=5 // pred_fallthru
      _
  $region6: #{cbam_forward.7} parent=0 // loop_footer
    %s13 = sadd.s32 1, %s9
  $region7: #{cbam_forward.7} parent=0 // loop_footer_branch
    %8 = sbr.rel target = $region3
  $region8: #{cbam_forward.7} parent=0 // loop_exit
    _

</llo_original>
